<compile_context>
chip_gen: v5e
topology: v5e:2x2
jax: 0.10.0
libtpu: 0.0.40
codegen_flags: <defaults>
</compile_context>

<pallas_src>
import functools

import jax
import jax.numpy as jnp
from jax.experimental import pallas as pl
from jax.experimental.pallas import tpu as pltpu


def _ffn_kernel(x_ref, w1_ref, b1_ref, w2_ref, b2_ref, g_ref, beta_ref,
                o_ref, acc_ref, *, eps):
    """One (row-tile, dff-chunk) grid step.

    Grid = (row_tiles ["parallel"], dff_chunks ["arbitrary"]).
    acc_ref: (tile_rows, d_model) f32 accumulator carrying Linear2 partial
    sums across dff chunks; residual + LayerNorm run on the last chunk only.
    """
    k = pl.program_id(1)
    nk = pl.num_programs(1)

    @pl.when(k == 0)
    def _init():
        acc_ref[...] = jnp.zeros_like(acc_ref)

    # Linear1 chunk + ReLU.  MXU operands stay in native (bf16) dtype,
    # accumulation in f32.
    x = x_ref[...]                                             # (TR, d_model)
    h = jnp.dot(x, w1_ref[...], preferred_element_type=jnp.float32)
    h = jnp.maximum(h + b1_ref[...].astype(jnp.float32), 0.0)  # (TR, dff_chunk)

    # Linear2 chunk, accumulated in f32 scratch.
    acc_ref[...] += jnp.dot(h.astype(w2_ref.dtype), w2_ref[...],
                            preferred_element_type=jnp.float32)

    # Epilogue: bias2 + (identity) dropout + residual + LayerNorm, once per
    # row tile.
    @pl.when(k == nk - 1)
    def _finalize():
        r = (x.astype(jnp.float32) + acc_ref[...]
             + b2_ref[...].astype(jnp.float32))                # (TR, d_model)
        mu = jnp.mean(r, axis=-1, keepdims=True)
        var = jnp.mean((r - mu) * (r - mu), axis=-1, keepdims=True)
        normed = (r - mu) * jax.lax.rsqrt(var + eps)
        out = (normed * g_ref[...].astype(jnp.float32)
               + beta_ref[...].astype(jnp.float32))
        o_ref[...] = out.astype(o_ref.dtype)


def feed_forward(x, w1, b1, w2, b2, gamma, beta, *, eps=1e-5,
                 tile_rows=256, dff_chunk=512, out_dtype=None,
                 vmem_limit_bytes=48 * 1024 * 1024):
    """x: (batch, seq, d_model) -> (batch, seq, d_model).

    Weights are stored transposed vs. nn.Linear: w1 (d_model, dff),
    w2 (dff, d_model), so the kernel computes plain x @ W + b.
    """
    batch, seq, d_model = x.shape
    dff = w1.shape[1]
    out_dtype = x.dtype if out_dtype is None else out_dtype

    # Lane-dense output / LayerNorm axis.
    # TODO(synk): mask-aware LayerNorm for d_model not a multiple of 128.
    assert d_model % 128 == 0, "d_model must be a multiple of 128"

    n = batch * seq
    x2d = x.reshape(n, d_model)

    # Pad rows up to a multiple of tile_rows (padded rows are discarded).
    n_pad = pl.cdiv(n, tile_rows) * tile_rows
    if n_pad != n:
        x2d = jnp.pad(x2d, ((0, n_pad - n), (0, 0)))

    # dff chunking; zero-pad the hidden dim if needed (exact no-op in math:
    # relu(0) @ 0-rows contributes nothing).
    dff_chunk = min(dff_chunk, dff)
    assert dff_chunk == dff or dff_chunk % 128 == 0, \
        "dff_chunk must be a multiple of 128 (or dff itself)"
    dff_pad = pl.cdiv(dff, dff_chunk) * dff_chunk
    if dff_pad != dff:
        w1 = jnp.pad(w1, ((0, 0), (0, dff_pad - dff)))
        b1 = jnp.pad(b1, (0, dff_pad - dff))
        w2 = jnp.pad(w2, ((0, dff_pad - dff), (0, 0)))
        dff = dff_pad

    # 2-D params so they land cleanly in VMEM tiles.
    b1_2d = b1.reshape(1, dff)
    b2_2d = b2.reshape(1, d_model)
    g_2d = gamma.reshape(1, d_model)
    bt_2d = beta.reshape(1, d_model)

    grid = (n_pad // tile_rows, dff // dff_chunk)

    out2d = pl.pallas_call(
        functools.partial(_ffn_kernel, eps=eps),
        out_shape=jax.ShapeDtypeStruct((n_pad, d_model), out_dtype),
        grid_spec=pltpu.PrefetchScalarGridSpec(
            num_scalar_prefetch=0,
            grid=grid,
            in_specs=[
                pl.BlockSpec((tile_rows, d_model), lambda i, k: (i, 0)),  # x rows
                pl.BlockSpec((d_model, dff_chunk), lambda i, k: (0, k)),  # W1 chunk
                pl.BlockSpec((1, dff_chunk),       lambda i, k: (0, k)),  # b1 chunk
                pl.BlockSpec((dff_chunk, d_model), lambda i, k: (k, 0)),  # W2 chunk
                pl.BlockSpec((1, d_model),         lambda i, k: (0, 0)),  # b2
                pl.BlockSpec((1, d_model),         lambda i, k: (0, 0)),  # gamma
                pl.BlockSpec((1, d_model),         lambda i, k: (0, 0)),  # beta
            ],
            out_specs=pl.BlockSpec((tile_rows, d_model), lambda i, k: (i, 0)),
            scratch_shapes=[pltpu.VMEM((tile_rows, d_model), jnp.float32)],
        ),
        compiler_params=pltpu.CompilerParams(
            dimension_semantics=("parallel", "arbitrary"),
            vmem_limit_bytes=vmem_limit_bytes,
        ),
    )(x2d, w1, b1_2d, w2, b2_2d, g_2d, bt_2d)

    return out2d[:n].reshape(batch, seq, d_model)


def _reference(x, w1, b1, w2, b2, gamma, beta, eps=1e-5):
    # Mirrors the kernel's dtype recipe: native-dtype MXU operands, f32 acc,
    # f32 LayerNorm.
    h = jnp.dot(x, w1, preferred_element_type=jnp.float32) + b1.astype(jnp.float32)
    h = jnp.maximum(h, 0.0).astype(w2.dtype)
    y = jnp.dot(h, w2, preferred_element_type=jnp.float32) + b2.astype(jnp.float32)
    r = x.astype(jnp.float32) + y
    mu = jnp.mean(r, axis=-1, keepdims=True)
    var = jnp.mean((r - mu) ** 2, axis=-1, keepdims=True)
    return ((r - mu) * jax.lax.rsqrt(var + eps)) * gamma + beta


if __name__ == "__main__":
    # Small but lane-aligned shapes for the FFN block.
    batch, seq, d_model, dff = 2, 8, 128, 512
    dropout = 0.1  # nn.Dropout -> identity at inference

    key = jax.random.PRNGKey(0)
    kx, k1, k2, k3, k4 = jax.random.split(key, 5)

    # bf16 activations/weights (MXU-native), f32 biases / LayerNorm params.
    x = jax.random.normal(kx, (batch, seq, d_model),
                          dtype=jnp.float32).astype(jnp.bfloat16)
    w1 = (jax.random.normal(k1, (d_model, dff), dtype=jnp.float32)
          * (1.0 / d_model ** 0.5)).astype(jnp.bfloat16)
    b1 = jax.random.normal(k2, (dff,), dtype=jnp.float32) * 0.01
    w2 = (jax.random.normal(k3, (dff, d_model), dtype=jnp.float32)
          * (1.0 / dff ** 0.5)).astype(jnp.bfloat16)
    b2 = jax.random.normal(k4, (d_model,), dtype=jnp.float32) * 0.01
    gamma = jnp.ones((d_model,), dtype=jnp.float32)
    beta = jnp.zeros((d_model,), dtype=jnp.float32)

    # dff_chunk=256 -> 2 hidden-dim chunks, exercising the accumulator path.
    out = feed_forward(x, w1, b1, w2, b2, gamma, beta,
                       dff_chunk=256, out_dtype=jnp.float32)
    out = jax.block_until_ready(out)

    ref = _reference(x, w1, b1, w2, b2, gamma, beta)
    assert out.shape == (batch, seq, d_model)
    assert jnp.allclose(out, ref, atol=1e-2, rtol=1e-2), "mismatch vs reference"

    print("KERNEL_OK")
</pallas_src>

<mosaic_0001>
module attributes {stable_mosaic.version = 11 : i64} {
  func.func @_ffn_kernel(%arg0: i32, %arg1: i32, %arg2: memref<256x128xbf16, #tpu.memory_space<vmem>>, %arg3: memref<128x256xbf16, #tpu.memory_space<vmem>>, %arg4: memref<1x256xf32, #tpu.memory_space<vmem>>, %arg5: memref<256x128xbf16, #tpu.memory_space<vmem>>, %arg6: memref<1x128xf32, #tpu.memory_space<vmem>>, %arg7: memref<1x128xf32, #tpu.memory_space<vmem>>, %arg8: memref<1x128xf32, #tpu.memory_space<vmem>>, %arg9: memref<256x128xf32, #tpu.memory_space<vmem>>, %arg10: memref<256x128xf32, #tpu.memory_space<vmem>>) attributes {dimension_semantics = [#tpu.dimension_semantics<parallel>, #tpu.dimension_semantics<arbitrary>], iteration_bounds = array<i64: 1, 2>, scalar_prefetch = 0 : i64, scratch_operands = 1 : i64, tpu.core_type = #tpu.core_type<tc>, window_params = [{transform_indices = @transform_0, window_bounds = array<i64: 256, 128>}, {transform_indices = @transform_1, window_bounds = array<i64: 128, 256>}, {transform_indices = @transform_2, window_bounds = array<i64: 1, 256>}, {transform_indices = @transform_3, window_bounds = array<i64: 256, 128>}, {pipeline_mode = #tpu.pipeline_mode<synchronous>, transform_indices = @transform_4, window_bounds = array<i64: 1, 128>}, {pipeline_mode = #tpu.pipeline_mode<synchronous>, transform_indices = @transform_5, window_bounds = array<i64: 1, 128>}, {pipeline_mode = #tpu.pipeline_mode<synchronous>, transform_indices = @transform_6, window_bounds = array<i64: 1, 128>}, {transform_indices = @transform_7, window_bounds = array<i64: 256, 128>}]} {
    %c0_i32 = arith.constant 0 : i32
    %0 = arith.cmpi eq, %arg1, %c0_i32 : i32
    %1 = arith.extui %0 : i1 to i32
    %c0_i32_0 = arith.constant 0 : i32
    %2 = arith.cmpi ne, %1, %c0_i32_0 : i32
    scf.if %2 {
      %cst_15 = arith.constant 0.000000e+00 : f32
      %20 = vector.broadcast %cst_15 : f32 to vector<256x128xf32>
      %c0_16 = arith.constant 0 : index
      %c0_17 = arith.constant 0 : index
      %21 = vector.load %arg10[%c0_16, %c0_17] : memref<256x128xf32, #tpu.memory_space<vmem>>, vector<256x128xf32>
      tpu.vector_store %arg10[%c0_16, %c0_17], %20 {strides = array<i32>} : memref<256x128xf32, #tpu.memory_space<vmem>>, vector<256x128xf32>,
    } else {
    }
    %c0 = arith.constant 0 : index
    %c0_1 = arith.constant 0 : index
    %3 = vector.load %arg2[%c0, %c0_1] : memref<256x128xbf16, #tpu.memory_space<vmem>>, vector<256x128xbf16>
    %c0_2 = arith.constant 0 : index
    %c0_3 = arith.constant 0 : index
    %4 = vector.load %arg3[%c0_2, %c0_3] : memref<128x256xbf16, #tpu.memory_space<vmem>>, vector<128x256xbf16>
    %cst = arith.constant dense<0.000000e+00> : vector<256x256xf32>
    %5 = tpu.matmul %3, %4, %cst {dimension_numbers = #tpu.dot_dimension_numbers<[1], [0], [0], [1], [0, 0, 1, 1], [], []>} : vector<256x128xbf16>, vector<128x256xbf16>, vector<256x256xf32> -> vector<256x256xf32>
    %c0_4 = arith.constant 0 : index
    %c0_5 = arith.constant 0 : index
    %6 = vector.load %arg4[%c0_4, %c0_5] : memref<1x256xf32, #tpu.memory_space<vmem>>, vector<1x256xf32>
    %7 = vector.broadcast %6 : vector<1x256xf32> to vector<256x256xf32>
    %8 = arith.addf %5, %7 : vector<256x256xf32>
    %cst_6 = arith.constant 0.000000e+00 : f32
    %9 = vector.broadcast %cst_6 : f32 to vector<256x256xf32>
    %10 = arith.maximumf %8, %9 : vector<256x256xf32>
    %c0_7 = arith.constant 0 : index
    %c0_8 = arith.constant 0 : index
    %11 = vector.load %arg10[%c0_7, %c0_8] : memref<256x128xf32, #tpu.memory_space<vmem>>, vector<256x128xf32>
    %12 = arith.truncf %10 : vector<256x256xf32> to vector<256x256xbf16>
    %c0_9 = arith.constant 0 : index
    %c0_10 = arith.constant 0 : index
    %13 = vector.load %arg5[%c0_9, %c0_10] : memref<256x128xbf16, #tpu.memory_space<vmem>>, vector<256x128xbf16>
    %cst_11 = arith.constant dense<0.000000e+00> : vector<256x128xf32>
    %14 = tpu.matmul %12, %13, %cst_11 {dimension_numbers = #tpu.dot_dimension_numbers<[1], [0], [0], [1], [0, 0, 1, 1], [], []>} : vector<256x256xbf16>, vector<256x128xbf16>, vector<256x128xf32> -> vector<256x128xf32>
    %15 = arith.addf %11, %14 : vector<256x128xf32>
    %c0_12 = arith.constant 0 : index
    %c0_13 = arith.constant 0 : index
    %16 = vector.load %arg10[%c0_12, %c0_13] : memref<256x128xf32, #tpu.memory_space<vmem>>, vector<256x128xf32>
    tpu.vector_store %arg10[%c0_12, %c0_13], %15 {strides = array<i32>} : memref<256x128xf32, #tpu.memory_space<vmem>>, vector<256x128xf32>,
    %c1_i32 = arith.constant 1 : i32
    %17 = arith.cmpi eq, %arg1, %c1_i32 : i32
    %18 = arith.extui %17 : i1 to i32
    %c0_i32_14 = arith.constant 0 : i32
    %19 = arith.cmpi ne, %18, %c0_i32_14 : i32
    scf.if %19 {
      %20 = arith.extf %3 : vector<256x128xbf16> to vector<256x128xf32>
      %c0_15 = arith.constant 0 : index
      %c0_16 = arith.constant 0 : index
      %21 = vector.load %arg10[%c0_15, %c0_16] : memref<256x128xf32, #tpu.memory_space<vmem>>, vector<256x128xf32>
      %22 = arith.addf %20, %21 : vector<256x128xf32>
      %c0_17 = arith.constant 0 : index
      %c0_18 = arith.constant 0 : index
      %23 = vector.load %arg6[%c0_17, %c0_18] : memref<1x128xf32, #tpu.memory_space<vmem>>, vector<1x128xf32>
      %24 = vector.broadcast %23 : vector<1x128xf32> to vector<256x128xf32>
      %25 = arith.addf %22, %24 : vector<256x128xf32>
      %cst_19 = arith.constant dense<0.000000e+00> : vector<256xf32>
      %26 = vector.multi_reduction <add>, %25, %cst_19 [1] : vector<256x128xf32> to vector<256xf32>
      %27 = vector.shape_cast %26 : vector<256xf32> to vector<256x1xf32>
      %cst_20 = arith.constant 1.280000e+02 : f32
      %28 = vector.broadcast %cst_20 : f32 to vector<256x1xf32>
      %29 = arith.divf %27, %28 : vector<256x1xf32>
      %30 = vector.broadcast %29 : vector<256x1xf32> to vector<256x128xf32>
      %31 = arith.subf %25, %30 : vector<256x128xf32>
      %32 = vector.broadcast %29 : vector<256x1xf32> to vector<256x128xf32>
      %33 = arith.subf %25, %32 : vector<256x128xf32>
      %34 = arith.mulf %31, %33 : vector<256x128xf32>
      %cst_21 = arith.constant dense<0.000000e+00> : vector<256xf32>
      %35 = vector.multi_reduction <add>, %34, %cst_21 [1] : vector<256x128xf32> to vector<256xf32>
      %36 = vector.shape_cast %35 : vector<256xf32> to vector<256x1xf32>
      %cst_22 = arith.constant 1.280000e+02 : f32
      %37 = vector.broadcast %cst_22 : f32 to vector<256x1xf32>
      %38 = arith.divf %36, %37 : vector<256x1xf32>
      %39 = vector.broadcast %29 : vector<256x1xf32> to vector<256x128xf32>
      %40 = arith.subf %25, %39 : vector<256x128xf32>
      %cst_23 = arith.constant 9.99999974E-6 : f32
      %41 = vector.broadcast %cst_23 : f32 to vector<256x1xf32>
      %42 = arith.addf %38, %41 : vector<256x1xf32>
      %43 = math.rsqrt %42 : vector<256x1xf32>
      %44 = vector.broadcast %43 : vector<256x1xf32> to vector<256x128xf32>
      %45 = arith.mulf %40, %44 : vector<256x128xf32>
      %c0_24 = arith.constant 0 : index
      %c0_25 = arith.constant 0 : index
      %46 = vector.load %arg7[%c0_24, %c0_25] : memref<1x128xf32, #tpu.memory_space<vmem>>, vector<1x128xf32>
      %47 = vector.broadcast %46 : vector<1x128xf32> to vector<256x128xf32>
      %48 = arith.mulf %45, %47 : vector<256x128xf32>
      %c0_26 = arith.constant 0 : index
      %c0_27 = arith.constant 0 : index
      %49 = vector.load %arg8[%c0_26, %c0_27] : memref<1x128xf32, #tpu.memory_space<vmem>>, vector<1x128xf32>
      %50 = vector.broadcast %49 : vector<1x128xf32> to vector<256x128xf32>
      %51 = arith.addf %48, %50 : vector<256x128xf32>
      %c0_28 = arith.constant 0 : index
      %c0_29 = arith.constant 0 : index
      %52 = vector.load %arg9[%c0_28, %c0_29] : memref<256x128xf32, #tpu.memory_space<vmem>>, vector<256x128xf32>
      tpu.vector_store %arg9[%c0_28, %c0_29], %51 {strides = array<i32>} : memref<256x128xf32, #tpu.memory_space<vmem>>, vector<256x128xf32>,
    } else {
    }
    return
  }
  func.func @transform_0(%arg0: i32, %arg1: i32) -> (i32, i32) {
    %c0_i32 = arith.constant 0 : i32
    %c0_i32_0 = arith.constant 0 : i32
    return %arg0, %c0_i32 : i32, i32
  }
  func.func @transform_1(%arg0: i32, %arg1: i32) -> (i32, i32) {
    %c0_i32 = arith.constant 0 : i32
    %c0_i32_0 = arith.constant 0 : i32
    return %c0_i32, %arg1 : i32, i32
  }
  func.func @transform_2(%arg0: i32, %arg1: i32) -> (i32, i32) {
    %c0_i32 = arith.constant 0 : i32
    %c0_i32_0 = arith.constant 0 : i32
    return %c0_i32, %arg1 : i32, i32
  }
  func.func @transform_3(%arg0: i32, %arg1: i32) -> (i32, i32) {
    %c0_i32 = arith.constant 0 : i32
    %c0_i32_0 = arith.constant 0 : i32
    return %arg1, %c0_i32 : i32, i32
  }
  func.func @transform_4(%arg0: i32, %arg1: i32) -> (i32, i32) {
    %c0_i32 = arith.constant 0 : i32
    %c0_i32_0 = arith.constant 0 : i32
    %c0_i32_1 = arith.constant 0 : i32
    return %c0_i32, %c0_i32_0 : i32, i32
  }
  func.func @transform_5(%arg0: i32, %arg1: i32) -> (i32, i32) {
    %c0_i32 = arith.constant 0 : i32
    %c0_i32_0 = arith.constant 0 : i32
    %c0_i32_1 = arith.constant 0 : i32
    return %c0_i32, %c0_i32_0 : i32, i32
  }
  func.func @transform_6(%arg0: i32, %arg1: i32) -> (i32, i32) {
    %c0_i32 = arith.constant 0 : i32
    %c0_i32_0 = arith.constant 0 : i32
    %c0_i32_1 = arith.constant 0 : i32
    return %c0_i32, %c0_i32_0 : i32, i32
  }
  func.func @transform_7(%arg0: i32, %arg1: i32) -> (i32, i32) {
    %c0_i32 = arith.constant 0 : i32
    %c0_i32_0 = arith.constant 0 : i32
    return %arg0, %c0_i32 : i32, i32
  }
}

</mosaic_0001>

<llo_original>
// kernel: tpu_custom_call.1
$region0: #{tpu_custom_call.1}
  #allocation0 [shape = 'u32[]', space=smem, size = 0x4, offset = 0x4, fixed_abs, tag = 'smem constant byte address 0x4 - core index']
  #allocation1 [shape = 'u32[72,128]{1,0:T(1,128)}', space=vmem, size = 0x9000, scoped, tag = 'internal scratch']
  #allocation2 [shape = 'f32[256,128]{1,0:T(8,128)}', space=vmem, size = 0x20000, scoped, tag = 'scratch operand']
  %s0 = inlined_call_operand.hbm [shape: bf16[256,128], index: 0, kind: input, shape index: {}]
  %s1 = inlined_call_operand.hbm [shape: bf16[128,512], index: 1, kind: input, shape index: {}]
  %s2 = inlined_call_operand.hbm [shape: f32[1,512], index: 2, kind: input, shape index: {}]
  %s3 = inlined_call_operand.hbm [shape: bf16[512,128], index: 3, kind: input, shape index: {}]
  %s4 = inlined_call_operand.vmem [shape: f32[1,128], index: 4, kind: input, shape index: {}]
  %s5 = inlined_call_operand.vmem [shape: f32[1,128], index: 5, kind: input, shape index: {}]
  %s6 = inlined_call_operand.vmem [shape: f32[1,128], index: 6, kind: input, shape index: {}]
  %s7 = inlined_call_operand.hbm [shape: f32[256,128], index: 7, kind: output, shape index: {}]
  %s8 = sld [smem:[#allocation0]]
  $region85: #{tpu_custom_call.1} parent=0
    _
  %s10 = ssub.s32 1, %s8
  %s11 = scalar_select 0, %s10, %s8
  $region1: #{tpu_custom_call.1} parent=0
    #allocation3 [shape = 'u8[65536]{0}', space=vmem, size = 0x10000, scoped, tag = 'input window, operand 0, single buffered']
    #allocation4 [shape = 's32[2]{0}', space=sflag, size = 0x8, scoped, tag = 'scoped memory for tpu_custom_call.1']
    #allocation5 [shape = 's32[2]{0}', space=sflag, size = 0x8, scoped, tag = 'scoped memory for tpu_custom_call.1']
    #allocation6 [shape = 'u8[131072]{0}', space=vmem, size = 0x20000, scoped, tag = 'input window, operand 1']
    #allocation7 [shape = 's32[2]{0}', space=sflag, size = 0x8, scoped, tag = 'scoped memory for tpu_custom_call.1']
    #allocation8 [shape = 'u8[2048]{0}', space=vmem, size = 0x800, scoped, tag = 'input window, operand 2']
    #allocation9 [shape = 'u8[131072]{0}', space=vmem, size = 0x20000, scoped, tag = 'input window, operand 3']
    #allocation10 [shape = 's32[2]{0}', space=sflag, size = 0x8, scoped, tag = 'scoped memory for tpu_custom_call.1']
    #allocation11 [shape = 'u8[131072]{0}', space=vmem, size = 0x20000, scoped, tag = 'output window, operand 0, single buffered']
    %12 = vsyncpa [#allocation4], 0
    %13 = vsyncpa [#allocation7], 0
    %s14 = scalar_lea.sflag [#allocation7], 1
    %15 = vsyncpa %s14, 0
    %16 = vsyncpa [#allocation10], 0
    %s17 = scalar_lea.sflag [#allocation10], 1
    %18 = vsyncpa %s17, 0
    %19 = vsyncpa [#allocation5], 0
    loop: start=0, step=1, limit=4
    $region2: #{tpu_custom_call.1} parent=1 // loop_pre_header
      _
    $region3: #{tpu_custom_call.1} parent=1 // loop_header
      %s21 = sphi 0, %s25
      %p22 = scmp.ge.s32.totalorder %s21, 4
      %s28 = sphi 0, %s40
      %s29 = sphi 0, %s36
      %s30 = sphi 0, %s28
      %s31 = sphi 0, %s29
      %s32 = sphi 0, %s30
      %s33 = sphi 0, %s31
      %s43 = sphi 0, %s45
      %s46 = sphi 0, %s43
      %s47 = sphi 0, %s46
      %s63 = sphi 0, %s47
      %s69 = sphi 0, %s71
      %s72 = sphi 0, %s69
      %s73 = sphi 0, %s72
      %s89 = sphi 0, %s73
      %s95 = sphi 0, %s97
      %s98 = sphi 0, %s95
      %s99 = sphi 0, %s98
      %s115 = sphi 0, %s99
      %s121 = sphi 0, %s123
      %s124 = sphi 0, %s121
      %s125 = sphi 0, %s124
      %s141 = sphi 0, %s125
      %s145 = sphi 0, %s145
      %s147 = sphi 0, %s145
      %s148 = sphi 0, %s147
      %s162 = sphi 0, %s148
      %s166 = sphi 0, %s166
      %s168 = sphi 0, %s166
      %s169 = sphi 0, %s168
      %s183 = sphi 0, %s169
      %s187 = sphi 0, %s187
      %s189 = sphi 0, %s187
      %s190 = sphi 0, %s189
      %s204 = sphi 0, %s190
      %s210 = sphi 0, %s212
      %s213 = sphi 0, %s210
      %s214 = sphi 0, %s213
      %s230 = sphi 0, %s214
    $region4: #{tpu_custom_call.1} parent=1 // loop_header_branch
      %24 = sbr.rel (%p22) target = $region8
    $region5: #{tpu_custom_call.1} parent=1 // loop_body
      %s26 = ssub.s32 %s21, 1
      %s27 = ssub.s32 %s21, 2
      %s34 = sadd.s32 1, %s29
      %p35 = scmp.ge.s32.totalorder %s34, 2
      %s36 = scalar_select %p35, 0, %s34
      %s37 = sadd.s32 1, %s28
      %s38 = scalar_select %p35, %s37, %s28
      %p39 = scmp.ge.s32.totalorder %s38, 1
      %s40 = scalar_select %p39, 0, %s38
      %s41 = ssub.s32 %s28, %s40
      %p42 = scmp.eq.s32.totalorder %s41, 0
      %s44 = sadd.s32 %s43, 1
      %s45 = scalar_select %p42, %s43, %s44
      %p48 = pneg %p42
      %p49 = scmp.eq.s32.totalorder %s21, 1
      %p50 = por %p48, %p49
      %p51 = scmp.ne.s32.totalorder %s43, %s46
      %p52 = scmp.eq.s32.totalorder %s21, 0
      %p53 = por %p51, %p52
      %p54 = scmp.ne.s32.totalorder %s43, %s46
      %p55 = scmp.eq.s32.totalorder %s26, 1
      %p56 = por %p54, %p55
      %p57 = scmp.ne.s32.totalorder %s46, %s47
      %p58 = scmp.eq.s32.totalorder %s26, 0
      %p59 = por %p57, %p58
      %p60 = scmp.ne.s32.totalorder %s46, %s47
      %p61 = scmp.eq.s32.totalorder %s27, 1
      %p62 = por %p60, %p61
      %p64 = scmp.ne.s32.totalorder %s47, %s63
      %p65 = scmp.eq.s32.totalorder %s27, 0
      %p66 = por %p64, %p65
      %s67 = ssub.s32 %s29, %s36
      %p68 = scmp.eq.s32.totalorder %s67, 0
      %s70 = sadd.s32 %s69, 1
      %s71 = scalar_select %p68, %s69, %s70
      %p74 = pneg %p68
      %p75 = scmp.eq.s32.totalorder %s21, 1
      %p76 = por %p74, %p75
      %p77 = scmp.ne.s32.totalorder %s69, %s72
      %p78 = scmp.eq.s32.totalorder %s21, 0
      %p79 = por %p77, %p78
      %p80 = scmp.ne.s32.totalorder %s69, %s72
      %p81 = scmp.eq.s32.totalorder %s26, 1
      %p82 = por %p80, %p81
      %p83 = scmp.ne.s32.totalorder %s72, %s73
      %p84 = scmp.eq.s32.totalorder %s26, 0
      %p85 = por %p83, %p84
      %p86 = scmp.ne.s32.totalorder %s72, %s73
      %p87 = scmp.eq.s32.totalorder %s27, 1
      %p88 = por %p86, %p87
      %p90 = scmp.ne.s32.totalorder %s73, %s89
      %p91 = scmp.eq.s32.totalorder %s27, 0
      %p92 = por %p90, %p91
      %s93 = ssub.s32 %s29, %s36
      %p94 = scmp.eq.s32.totalorder %s93, 0
      %s96 = sadd.s32 %s95, 1
      %s97 = scalar_select %p94, %s95, %s96
      %p100 = pneg %p94
      %p101 = scmp.eq.s32.totalorder %s21, 1
      %p102 = por %p100, %p101
      %p103 = scmp.ne.s32.totalorder %s95, %s98
      %p104 = scmp.eq.s32.totalorder %s21, 0
      %p105 = por %p103, %p104
      %p106 = scmp.ne.s32.totalorder %s95, %s98
      %p107 = scmp.eq.s32.totalorder %s26, 1
      %p108 = por %p106, %p107
      %p109 = scmp.ne.s32.totalorder %s98, %s99
      %p110 = scmp.eq.s32.totalorder %s26, 0
      %p111 = por %p109, %p110
      %p112 = scmp.ne.s32.totalorder %s98, %s99
      %p113 = scmp.eq.s32.totalorder %s27, 1
      %p114 = por %p112, %p113
      %p116 = scmp.ne.s32.totalorder %s99, %s115
      %p117 = scmp.eq.s32.totalorder %s27, 0
      %p118 = por %p116, %p117
      %s119 = ssub.s32 %s29, %s36
      %p120 = scmp.eq.s32.totalorder %s119, 0
      %s122 = sadd.s32 %s121, 1
      %s123 = scalar_select %p120, %s121, %s122
      %p126 = pneg %p120
      %p127 = scmp.eq.s32.totalorder %s21, 1
      %p128 = por %p126, %p127
      %p129 = scmp.ne.s32.totalorder %s121, %s124
      %p130 = scmp.eq.s32.totalorder %s21, 0
      %p131 = por %p129, %p130
      %p132 = scmp.ne.s32.totalorder %s121, %s124
      %p133 = scmp.eq.s32.totalorder %s26, 1
      %p134 = por %p132, %p133
      %p135 = scmp.ne.s32.totalorder %s124, %s125
      %p136 = scmp.eq.s32.totalorder %s26, 0
      %p137 = por %p135, %p136
      %p138 = scmp.ne.s32.totalorder %s124, %s125
      %p139 = scmp.eq.s32.totalorder %s27, 1
      %p140 = por %p138, %p139
      %p142 = scmp.ne.s32.totalorder %s125, %s141
      %p143 = scmp.eq.s32.totalorder %s27, 0
      %p144 = por %p142, %p143
      %s146 = sadd.s32 %s145, 1
      %p149 = scmp.eq.s32.totalorder %s21, 1
      %p150 = scmp.ne.s32.totalorder %s145, %s147
      %p151 = scmp.eq.s32.totalorder %s21, 0
      %p152 = por %p150, %p151
      %p153 = scmp.ne.s32.totalorder %s145, %s147
      %p154 = scmp.eq.s32.totalorder %s26, 1
      %p155 = por %p153, %p154
      %p156 = scmp.ne.s32.totalorder %s147, %s148
      %p157 = scmp.eq.s32.totalorder %s26, 0
      %p158 = por %p156, %p157
      %p159 = scmp.ne.s32.totalorder %s147, %s148
      %p160 = scmp.eq.s32.totalorder %s27, 1
      %p161 = por %p159, %p160
      %p163 = scmp.ne.s32.totalorder %s148, %s162
      %p164 = scmp.eq.s32.totalorder %s27, 0
      %p165 = por %p163, %p164
      %s167 = sadd.s32 %s166, 1
      %p170 = scmp.eq.s32.totalorder %s21, 1
      %p171 = scmp.ne.s32.totalorder %s166, %s168
      %p172 = scmp.eq.s32.totalorder %s21, 0
      %p173 = por %p171, %p172
      %p174 = scmp.ne.s32.totalorder %s166, %s168
      %p175 = scmp.eq.s32.totalorder %s26, 1
      %p176 = por %p174, %p175
      %p177 = scmp.ne.s32.totalorder %s168, %s169
      %p178 = scmp.eq.s32.totalorder %s26, 0
      %p179 = por %p177, %p178
      %p180 = scmp.ne.s32.totalorder %s168, %s169
      %p181 = scmp.eq.s32.totalorder %s27, 1
      %p182 = por %p180, %p181
      %p184 = scmp.ne.s32.totalorder %s169, %s183
      %p185 = scmp.eq.s32.totalorder %s27, 0
      %p186 = por %p184, %p185
      %s188 = sadd.s32 %s187, 1
      %p191 = scmp.eq.s32.totalorder %s21, 1
      %p192 = scmp.ne.s32.totalorder %s187, %s189
      %p193 = scmp.eq.s32.totalorder %s21, 0
      %p194 = por %p192, %p193
      %p195 = scmp.ne.s32.totalorder %s187, %s189
      %p196 = scmp.eq.s32.totalorder %s26, 1
      %p197 = por %p195, %p196
      %p198 = scmp.ne.s32.totalorder %s189, %s190
      %p199 = scmp.eq.s32.totalorder %s26, 0
      %p200 = por %p198, %p199
      %p201 = scmp.ne.s32.totalorder %s189, %s190
      %p202 = scmp.eq.s32.totalorder %s27, 1
      %p203 = por %p201, %p202
      %p205 = scmp.ne.s32.totalorder %s190, %s204
      %p206 = scmp.eq.s32.totalorder %s27, 0
      %p207 = por %p205, %p206
      %s208 = ssub.s32 %s28, %s40
      %p209 = scmp.eq.s32.totalorder %s208, 0
      %s211 = sadd.s32 %s210, 1
      %s212 = scalar_select %p209, %s210, %s211
      %p215 = pneg %p209
      %p216 = scmp.eq.s32.totalorder %s21, 1
      %p217 = por %p215, %p216
      %p218 = scmp.ne.s32.totalorder %s210, %s213
      %p219 = scmp.eq.s32.totalorder %s21, 0
      %p220 = por %p218, %p219
      %p221 = scmp.ne.s32.totalorder %s210, %s213
      %p222 = scmp.eq.s32.totalorder %s26, 1
      %p223 = por %p221, %p222
      %p224 = scmp.ne.s32.totalorder %s213, %s214
      %p225 = scmp.eq.s32.totalorder %s26, 0
      %p226 = por %p224, %p225
      %p227 = scmp.ne.s32.totalorder %s213, %s214
      %p228 = scmp.eq.s32.totalorder %s27, 1
      %p229 = por %p227, %p228
      %p231 = scmp.ne.s32.totalorder %s214, %s230
      %p232 = scmp.eq.s32.totalorder %s27, 0
      %p233 = por %p231, %p232
      %p234 = scmp.le.s32.totalorder 1, %s21
      %p235 = scmp.lt.s32.totalorder %s21, 3
      %p236 = pnand %p234, %p235
      %p237 = pneg %p236
      // Predicated region
      $region9: #{tpu_custom_call.1} parent=5 // pred_check
        _
      $region10: #{tpu_custom_call.1} parent=5 // pred_check_branch
        %239 = sbr.rel (%p236) target = $region12
      $region11: #{tpu_custom_call.1} parent=5 // pred_region
        %s240 = ssub.s32 %s21, 1
        // Predicated region
        $region13: #{tpu_custom_call.1} parent=11 // pred_check
          %p241 = pneg %p59
        $region14: #{tpu_custom_call.1} parent=11 // pred_check_branch
          %243 = sbr.rel (%p241) target = $region16
        $region15: #{tpu_custom_call.1} parent=11 // pred_region
          %s244 = smul.u32 32, %s30
          %246 = vsyncadd [#allocation4], 0
          %s247 = smul.addr %s244, 4
          %s248 = scalar_lea.hbm %s0, %s247
          %s249 = sshll.u32 %s248, 4
          %s250 = int_to_ptr.hbm [resolvable:$true] %s249
          %s251 = sshll.u32 [#allocation3], 4
          %s252 = int_to_ptr.vmem [resolvable:$true] %s251
          %257 = dma.hbm_to_vmem [thread:$0]  %s250, 2048, %s252, [#allocation4], 64, 64, 4
        $region16: #{tpu_custom_call.1} parent=11 // pred_fallthru
          _
        // Predicated region
        $region17: #{tpu_custom_call.1} parent=11 // pred_check
          %p258 = pneg %p158
        $region18: #{tpu_custom_call.1} parent=11 // pred_check_branch
          %260 = sbr.rel (%p258) target = $region20
        $region19: #{tpu_custom_call.1} parent=11 // pred_region
          _
        $region20: #{tpu_custom_call.1} parent=11 // pred_fallthru
          _
        // Predicated region
        $region21: #{tpu_custom_call.1} parent=11 // pred_check
          %p261 = pneg %p179
        $region22: #{tpu_custom_call.1} parent=11 // pred_check_branch
          %263 = sbr.rel (%p261) target = $region24
        $region23: #{tpu_custom_call.1} parent=11 // pred_region
          _
        $region24: #{tpu_custom_call.1} parent=11 // pred_fallthru
          _
        // Predicated region
        $region25: #{tpu_custom_call.1} parent=11 // pred_check
          %p264 = pneg %p200
        $region26: #{tpu_custom_call.1} parent=11 // pred_check_branch
          %266 = sbr.rel (%p264) target = $region28
        $region27: #{tpu_custom_call.1} parent=11 // pred_region
          _
        $region28: #{tpu_custom_call.1} parent=11 // pred_fallthru
          _
      $region12: #{tpu_custom_call.1} parent=5 // pred_fallthru
        _
      %p267 = scmp.lt.s32.totalorder %s21, 2
      // Predicated region
      $region29: #{tpu_custom_call.1} parent=5 // pred_check
        %p268 = pneg %p267
      $region30: #{tpu_custom_call.1} parent=5 // pred_check_branch
        %270 = sbr.rel (%p268) target = $region32
      $region31: #{tpu_custom_call.1} parent=5 // pred_region
        // Predicated region
        $region33: #{tpu_custom_call.1} parent=31 // pred_check
          %p271 = pneg %p79
        $region34: #{tpu_custom_call.1} parent=31 // pred_check_branch
          %273 = sbr.rel (%p271) target = $region36
        $region35: #{tpu_custom_call.1} parent=31 // pred_region
          %s274 = sand.u32 %s21, 1
          %s275 = scalar_lea.sflag [#allocation7], %s274
          %s276 = sand.u32 %s69, 1
          %s277 = smul.addr %s276, 128
          %s278 = scalar_lea.vmem [#allocation6], %s277
          %s279 = smul.u32 2, %s29
          %281 = vsyncadd %s275, 0
          %s282 = smul.addr %s279, 4
          %s283 = scalar_lea.hbm %s1, %s282
          %s284 = sshll.u32 %s283, 4
          %s285 = int_to_ptr.hbm [resolvable:$true] %s284
          %s286 = sshll.u32 %s278, 4
          %s287 = int_to_ptr.vmem [resolvable:$true] %s286
          %292 = dma.hbm_to_vmem [thread:$0]  %s285, 2048, %s287, %s275, 256, 128, 8
        $region36: #{tpu_custom_call.1} parent=31 // pred_fallthru
          _
        // Predicated region
        $region37: #{tpu_custom_call.1} parent=31 // pred_check
          %p293 = pneg %p105
        $region38: #{tpu_custom_call.1} parent=31 // pred_check_branch
          %295 = sbr.rel (%p293) target = $region40
        $region39: #{tpu_custom_call.1} parent=31 // pred_region
          %s296 = sand.u32 %s21, 1
          %s297 = scalar_lea.sflag [#allocation7], %s296
          %s298 = sand.u32 %s95, 1
          %s299 = smul.addr %s298, 2
          %s300 = scalar_lea.vmem [#allocation8], %s299
          %s301 = smul.u32 2, %s29
          %303 = vsyncadd %s297, 0
          %s304 = scalar_lea.hbm %s2, %s301
          %s306 = sshll.u32 %s304, 4
          %s307 = int_to_ptr.hbm [resolvable:$true] %s306
          %s308 = sshll.u32 %s300, 4
          %s309 = int_to_ptr.vmem [resolvable:$true] %s308
          %311 = dma.hbm_to_vmem [thread:$0]  %s307, 32, %s309, %s297
        $region40: #{tpu_custom_call.1} parent=31 // pred_fallthru
          _
        // Predicated region
        $region41: #{tpu_custom_call.1} parent=31 // pred_check
          %p312 = pneg %p131
        $region42: #{tpu_custom_call.1} parent=31 // pred_check_branch
          %314 = sbr.rel (%p312) target = $region44
        $region43: #{tpu_custom_call.1} parent=31 // pred_region
          %s315 = sand.u32 %s121, 1
          %s316 = scalar_lea.sflag [#allocation10], %s315
          %s317 = sand.u32 %s121, 1
          %s318 = smul.addr %s317, 128
          %s319 = scalar_lea.vmem [#allocation9], %s318
          %s320 = smul.u32 32, %s29
          %322 = vsyncadd %s316, 0
          %s323 = smul.addr %s320, 4
          %s324 = scalar_lea.hbm %s3, %s323
          %s325 = sshll.u32 %s324, 4
          %s326 = int_to_ptr.hbm [resolvable:$true] %s325
          %s327 = sshll.u32 %s319, 4
          %s328 = int_to_ptr.vmem [resolvable:$true] %s327
          %333 = dma.hbm_to_vmem [thread:$0]  %s326, 2048, %s328, %s316, 64, 64, 4
        $region44: #{tpu_custom_call.1} parent=31 // pred_fallthru
          _
      $region32: #{tpu_custom_call.1} parent=5 // pred_fallthru
        _
      %p334 = scmp.le.s32.totalorder 1, %s21
      %p335 = scmp.lt.s32.totalorder %s21, 3
      %p336 = pnand %p334, %p335
      %p337 = pneg %p336
      // Predicated region
      $region45: #{tpu_custom_call.1} parent=5 // pred_check
        _
      $region46: #{tpu_custom_call.1} parent=5 // pred_check_branch
        %339 = sbr.rel (%p336) target = $region48
      $region47: #{tpu_custom_call.1} parent=5 // pred_region
        %s340 = ssub.s32 %s21, 1
        // Predicated region
        $region49: #{tpu_custom_call.1} parent=47 // pred_check
          %p341 = pneg %p59
        $region50: #{tpu_custom_call.1} parent=47 // pred_check_branch
          %343 = sbr.rel (%p341) target = $region52
        $region51: #{tpu_custom_call.1} parent=47 // pred_region
          %345 = dma.done [#allocation4], 2048
        $region52: #{tpu_custom_call.1} parent=47 // pred_fallthru
          _
        %s346 = sand.u32 %s26, 1
        %s347 = scalar_lea.sflag [#allocation7], %s346
        %s348 = sand.u32 %s72, 1
        %s349 = smul.addr %s348, 128
        %s350 = scalar_lea.vmem [#allocation6], %s349
        // Predicated region
        $region53: #{tpu_custom_call.1} parent=47 // pred_check
          %p351 = pneg %p85
        $region54: #{tpu_custom_call.1} parent=47 // pred_check_branch
          %353 = sbr.rel (%p351) target = $region56
        $region55: #{tpu_custom_call.1} parent=47 // pred_region
          %355 = dma.done %s347, 2048
        $region56: #{tpu_custom_call.1} parent=47 // pred_fallthru
          _
        %s356 = sand.u32 %s26, 1
        %s357 = scalar_lea.sflag [#allocation7], %s356
        %s358 = sand.u32 %s98, 1
        %s359 = smul.addr %s358, 2
        %s360 = scalar_lea.vmem [#allocation8], %s359
        // Predicated region
        $region57: #{tpu_custom_call.1} parent=47 // pred_check
          %p361 = pneg %p111
        $region58: #{tpu_custom_call.1} parent=47 // pred_check_branch
          %363 = sbr.rel (%p361) target = $region60
        $region59: #{tpu_custom_call.1} parent=47 // pred_region
          %365 = dma.done %s357, 32
        $region60: #{tpu_custom_call.1} parent=47 // pred_fallthru
          _
        %s366 = sand.u32 %s124, 1
        %s367 = scalar_lea.sflag [#allocation10], %s366
        %s368 = sand.u32 %s124, 1
        %s369 = smul.addr %s368, 128
        %s370 = scalar_lea.vmem [#allocation9], %s369
        // Predicated region
        $region61: #{tpu_custom_call.1} parent=47 // pred_check
          %p371 = pneg %p137
        $region62: #{tpu_custom_call.1} parent=47 // pred_check_branch
          %373 = sbr.rel (%p371) target = $region64
        $region63: #{tpu_custom_call.1} parent=47 // pred_region
          %375 = dma.done %s367, 2048
        $region64: #{tpu_custom_call.1} parent=47 // pred_fallthru
          _
        %p376 = pneg %p59
        %p377 = pneg %p56
        %s378 = sand.u32 %s26, 1
        %s379 = scalar_lea.sflag [#allocation7], %s378
        %s380 = sand.u32 %s72, 1
        %s381 = smul.addr %s380, 128
        %s382 = scalar_lea.vmem [#allocation6], %s381
        %p383 = pneg %p85
        %p384 = pneg %p82
        %s385 = sand.u32 %s26, 1
        %s386 = scalar_lea.sflag [#allocation7], %s385
        %s387 = sand.u32 %s98, 1
        %s388 = smul.addr %s387, 2
        %s389 = scalar_lea.vmem [#allocation8], %s388
        %p390 = pneg %p111
        %p391 = pneg %p108
        %s392 = sand.u32 %s124, 1
        %s393 = scalar_lea.sflag [#allocation10], %s392
        %s394 = sand.u32 %s124, 1
        %s395 = smul.addr %s394, 128
        %s396 = scalar_lea.vmem [#allocation9], %s395
        %p397 = pneg %p137
        %p398 = pneg %p134
        %p399 = pneg %p158
        %p400 = pneg %p155
        %p401 = pneg %p179
        %p402 = pneg %p176
        %p403 = pneg %p200
        %p404 = pneg %p197
        %p405 = pneg %p226
        %p406 = pneg %p223
        %s407 = smul.u32 32, %s30
        %s408 = smul.u32 2, %s31
        %s409 = smul.u32 2, %s31
        %s410 = smul.u32 32, %s31
        %s411 = smul.u32 32, %s30
        %p412 = scmp.eq.s32.totalorder %s31, 0
        // Predicated region
        $region65: #{tpu_custom_call.1} parent=47 // pred_check
          %p413 = pneg %p412
        $region66: #{tpu_custom_call.1} parent=47 // pred_check_branch
          %415 = sbr.rel (%p413) target = $region68
        $region67: #{tpu_custom_call.1} parent=47 // pred_region
          %416 = vst [vmem:[#allocation2] sm:$0xff] 0.0
          %417 = vst [vmem:[#allocation2 + $0x8] sm:$0xff] 0.0
          %418 = vst [vmem:[#allocation2 + $0x10] sm:$0xff] 0.0
          %419 = vst [vmem:[#allocation2 + $0x18] sm:$0xff] 0.0
          %420 = vst [vmem:[#allocation2 + $0x20] sm:$0xff] 0.0
          %421 = vst [vmem:[#allocation2 + $0x28] sm:$0xff] 0.0
          %422 = vst [vmem:[#allocation2 + $0x30] sm:$0xff] 0.0
          %423 = vst [vmem:[#allocation2 + $0x38] sm:$0xff] 0.0
          %424 = vst [vmem:[#allocation2 + $0x40] sm:$0xff] 0.0
          %425 = vst [vmem:[#allocation2 + $0x48] sm:$0xff] 0.0
          %426 = vst [vmem:[#allocation2 + $0x50] sm:$0xff] 0.0
          %427 = vst [vmem:[#allocation2 + $0x58] sm:$0xff] 0.0
          %428 = vst [vmem:[#allocation2 + $0x60] sm:$0xff] 0.0
          %429 = vst [vmem:[#allocation2 + $0x68] sm:$0xff] 0.0
          %430 = vst [vmem:[#allocation2 + $0x70] sm:$0xff] 0.0
          %431 = vst [vmem:[#allocation2 + $0x78] sm:$0xff] 0.0
          %432 = vst [vmem:[#allocation2 + $0x80] sm:$0xff] 0.0
          %433 = vst [vmem:[#allocation2 + $0x88] sm:$0xff] 0.0
          %434 = vst [vmem:[#allocation2 + $0x90] sm:$0xff] 0.0
          %435 = vst [vmem:[#allocation2 + $0x98] sm:$0xff] 0.0
          %436 = vst [vmem:[#allocation2 + $0xa0] sm:$0xff] 0.0
          %437 = vst [vmem:[#allocation2 + $0xa8] sm:$0xff] 0.0
          %438 = vst [vmem:[#allocation2 + $0xb0] sm:$0xff] 0.0
          %439 = vst [vmem:[#allocation2 + $0xb8] sm:$0xff] 0.0
          %440 = vst [vmem:[#allocation2 + $0xc0] sm:$0xff] 0.0
          %441 = vst [vmem:[#allocation2 + $0xc8] sm:$0xff] 0.0
          %442 = vst [vmem:[#allocation2 + $0xd0] sm:$0xff] 0.0
          %443 = vst [vmem:[#allocation2 + $0xd8] sm:$0xff] 0.0
          %444 = vst [vmem:[#allocation2 + $0xe0] sm:$0xff] 0.0
          %445 = vst [vmem:[#allocation2 + $0xe8] sm:$0xff] 0.0
          %446 = vst [vmem:[#allocation2 + $0xf0] sm:$0xff] 0.0
          %447 = vst [vmem:[#allocation2 + $0xf8] sm:$0xff] 0.0
        $region68: #{tpu_custom_call.1} parent=47 // pred_fallthru
          _
        %v448 = vld [vmem:[#allocation3] sm:$0xf]
        %v449 = vld [vmem:[#allocation3 + $0x4] sm:$0xf]
        %v450 = vld [vmem:[#allocation3 + $0x8] sm:$0xf]
        %v451 = vld [vmem:[#allocation3 + $0xc] sm:$0xf]
        %v452 = vld [vmem:[#allocation3 + $0x10] sm:$0xf]
        %v453 = vld [vmem:[#allocation3 + $0x14] sm:$0xf]
        %v454 = vld [vmem:[#allocation3 + $0x18] sm:$0xf]
        %v455 = vld [vmem:[#allocation3 + $0x1c] sm:$0xf]
        %v456 = vld [vmem:[#allocation3 + $0x20] sm:$0xf]
        %v457 = vld [vmem:[#allocation3 + $0x24] sm:$0xf]
        %v458 = vld [vmem:[#allocation3 + $0x28] sm:$0xf]
        %v459 = vld [vmem:[#allocation3 + $0x2c] sm:$0xf]
        %v460 = vld [vmem:[#allocation3 + $0x30] sm:$0xf]
        %v461 = vld [vmem:[#allocation3 + $0x34] sm:$0xf]
        %v462 = vld [vmem:[#allocation3 + $0x38] sm:$0xf]
        %v463 = vld [vmem:[#allocation3 + $0x3c] sm:$0xf]
        %v464 = vld [vmem:[#allocation3 + $0x40] sm:$0xf]
        %v465 = vld [vmem:[#allocation3 + $0x44] sm:$0xf]
        %v466 = vld [vmem:[#allocation3 + $0x48] sm:$0xf]
        %v467 = vld [vmem:[#allocation3 + $0x4c] sm:$0xf]
        %v468 = vld [vmem:[#allocation3 + $0x50] sm:$0xf]
        %v469 = vld [vmem:[#allocation3 + $0x54] sm:$0xf]
        %v470 = vld [vmem:[#allocation3 + $0x58] sm:$0xf]
        %v471 = vld [vmem:[#allocation3 + $0x5c] sm:$0xf]
        %v472 = vld [vmem:[#allocation3 + $0x60] sm:$0xf]
        %v473 = vld [vmem:[#allocation3 + $0x64] sm:$0xf]
        %v474 = vld [vmem:[#allocation3 + $0x68] sm:$0xf]
        %v475 = vld [vmem:[#allocation3 + $0x6c] sm:$0xf]
        %v476 = vld [vmem:[#allocation3 + $0x70] sm:$0xf]
        %v477 = vld [vmem:[#allocation3 + $0x74] sm:$0xf]
        %v478 = vld [vmem:[#allocation3 + $0x78] sm:$0xf]
        %v479 = vld [vmem:[#allocation3 + $0x7c] sm:$0xf]
        %v480 = vld [vmem:[%s350] sm:$0xff]
        %v481 = vld [vmem:[%s350 + $0x8] sm:$0xff]
        %v482 = vld [vmem:[%s350 + $0x10] sm:$0xff]
        %v483 = vld [vmem:[%s350 + $0x18] sm:$0xff]
        %v484 = vld [vmem:[%s350 + $0x20] sm:$0xff]
        %v485 = vld [vmem:[%s350 + $0x28] sm:$0xff]
        %v486 = vld [vmem:[%s350 + $0x30] sm:$0xff]
        %v487 = vld [vmem:[%s350 + $0x38] sm:$0xff]
        %v488 = vld [vmem:[%s350 + $0x40] sm:$0xff]
        %v489 = vld [vmem:[%s350 + $0x48] sm:$0xff]
        %v490 = vld [vmem:[%s350 + $0x50] sm:$0xff]
        %v491 = vld [vmem:[%s350 + $0x58] sm:$0xff]
        %v492 = vld [vmem:[%s350 + $0x60] sm:$0xff]
        %v493 = vld [vmem:[%s350 + $0x68] sm:$0xff]
        %v494 = vld [vmem:[%s350 + $0x70] sm:$0xff]
        %v495 = vld [vmem:[%s350 + $0x78] sm:$0xff]
        %v496 = vld [vmem:[%s360] sm:$0x3]
        %v498 = vperm.slane %v496, 0
        %v499 = vperm.slane %v496, 1
        %v534 = vunpack.c.l.b16 %v448
        %v535 = vunpack.c.l.b16 %v449
        %v536 = vunpack.c.l.b16 %v450
        %v537 = vunpack.c.l.b16 %v451
        %v538 = vunpack.c.l.b16 %v452
        %v539 = vunpack.c.l.b16 %v453
        %v540 = vunpack.c.l.b16 %v454
        %v541 = vunpack.c.l.b16 %v455
        %v542 = vunpack.c.l.b16 %v456
        %v543 = vunpack.c.l.b16 %v457
        %v544 = vunpack.c.l.b16 %v458
        %v545 = vunpack.c.l.b16 %v459
        %v546 = vunpack.c.l.b16 %v460
        %v547 = vunpack.c.l.b16 %v461
        %v548 = vunpack.c.l.b16 %v462
        %v549 = vunpack.c.l.b16 %v463
        %v550 = vunpack.c.l.b16 %v464
        %v551 = vunpack.c.l.b16 %v465
        %v552 = vunpack.c.l.b16 %v466
        %v553 = vunpack.c.l.b16 %v467
        %v554 = vunpack.c.l.b16 %v468
        %v555 = vunpack.c.l.b16 %v469
        %v556 = vunpack.c.l.b16 %v470
        %v557 = vunpack.c.l.b16 %v471
        %v558 = vunpack.c.l.b16 %v472
        %v559 = vunpack.c.l.b16 %v473
        %v560 = vunpack.c.l.b16 %v474
        %v561 = vunpack.c.l.b16 %v475
        %v562 = vunpack.c.l.b16 %v476
        %v563 = vunpack.c.l.b16 %v477
        %v564 = vunpack.c.l.b16 %v478
        %v565 = vunpack.c.l.b16 %v479
        %v566 = vpack.c.b16 %v535, %v534
        %v567 = vpack.c.b16 %v537, %v536
        %v568 = vpack.c.b16 %v539, %v538
        %v569 = vpack.c.b16 %v541, %v540
        %v570 = vpack.c.b16 %v543, %v542
        %v571 = vpack.c.b16 %v545, %v544
        %v572 = vpack.c.b16 %v547, %v546
        %v573 = vpack.c.b16 %v549, %v548
        %v574 = vpack.c.b16 %v551, %v550
        %v575 = vpack.c.b16 %v553, %v552
        %v576 = vpack.c.b16 %v555, %v554
        %v577 = vpack.c.b16 %v557, %v556
        %v578 = vpack.c.b16 %v559, %v558
        %v579 = vpack.c.b16 %v561, %v560
        %v580 = vpack.c.b16 %v563, %v562
        %v581 = vpack.c.b16 %v565, %v564
        %v614 = vunpack.c.l.b16 %v480
        %v615 = vunpack.c.h.b16 %v480
        %v616 = vunpack.c.l.b16 %v481
        %v617 = vunpack.c.h.b16 %v481
        %v618 = vunpack.c.l.b16 %v482
        %v619 = vunpack.c.h.b16 %v482
        %v620 = vunpack.c.l.b16 %v483
        %v621 = vunpack.c.h.b16 %v483
        %v622 = vunpack.c.l.b16 %v484
        %v623 = vunpack.c.h.b16 %v484
        %v624 = vunpack.c.l.b16 %v485
        %v625 = vunpack.c.h.b16 %v485
        %v626 = vunpack.c.l.b16 %v486
        %v627 = vunpack.c.h.b16 %v486
        %v628 = vunpack.c.l.b16 %v487
        %v629 = vunpack.c.h.b16 %v487
        %v630 = vunpack.c.l.b16 %v488
        %v631 = vunpack.c.h.b16 %v488
        %v632 = vunpack.c.l.b16 %v489
        %v633 = vunpack.c.h.b16 %v489
        %v634 = vunpack.c.l.b16 %v490
        %v635 = vunpack.c.h.b16 %v490
        %v636 = vunpack.c.l.b16 %v491
        %v637 = vunpack.c.h.b16 %v491
        %v638 = vunpack.c.l.b16 %v492
        %v639 = vunpack.c.h.b16 %v492
        %v640 = vunpack.c.l.b16 %v493
        %v641 = vunpack.c.h.b16 %v493
        %v642 = vunpack.c.l.b16 %v494
        %v643 = vunpack.c.h.b16 %v494
        %v644 = vunpack.c.l.b16 %v495
        %v645 = vunpack.c.h.b16 %v495
        %v646 = vpack.c.b16 %v616, %v614
        %v647 = vpack.c.b16 %v617, %v615
        %v648 = vpack.c.b16 %v620, %v618
        %v649 = vpack.c.b16 %v621, %v619
        %v650 = vpack.c.b16 %v624, %v622
        %v651 = vpack.c.b16 %v625, %v623
        %v652 = vpack.c.b16 %v628, %v626
        %v653 = vpack.c.b16 %v629, %v627
        %v654 = vpack.c.b16 %v632, %v630
        %v655 = vpack.c.b16 %v633, %v631
        %v656 = vpack.c.b16 %v636, %v634
        %v657 = vpack.c.b16 %v637, %v635
        %v658 = vpack.c.b16 %v640, %v638
        %v659 = vpack.c.b16 %v641, %v639
        %v660 = vpack.c.b16 %v644, %v642
        %v661 = vpack.c.b16 %v645, %v643
        %678 = vmatpush.bf16.msra.mxu0 %v660
        %679 = vmatpush.bf16.msra.mxu0 %v658
        %680 = vmatpush.bf16.msra.mxu0 %v656
        %681 = vmatpush.bf16.msra.mxu0 %v654
        %682 = vmatpush.bf16.msra.mxu0 %v652
        %683 = vmatpush.bf16.msra.mxu0 %v650
        %684 = vmatpush.bf16.msra.mxu0 %v648
        %685 = vmatpush.bf16.msra.mxu0 %v646
        %686 = vmatmul.bf16.gmra.mxu0 %v566
        %v687 = vpop.f32.mrf.mxu0
        %v688 = vadd.f32 %v498, %v687
        %v689 = vpop.f32.mrf.mxu0
        %v690 = vadd.f32 %v498, %v689
        %691 = vmatmul.bf16.gmra.mxu0 %v567
        %v692 = vpop.f32.mrf.mxu0
        %v693 = vadd.f32 %v498, %v692
        %v694 = vpop.f32.mrf.mxu0
        %v695 = vadd.f32 %v498, %v694
        %696 = vmatmul.bf16.gmra.mxu0 %v568
        %v697 = vpop.f32.mrf.mxu0
        %v698 = vadd.f32 %v498, %v697
        %v699 = vpop.f32.mrf.mxu0
        %v700 = vadd.f32 %v498, %v699
        %701 = vmatmul.bf16.gmra.mxu0 %v569
        %v702 = vpop.f32.mrf.mxu0
        %v703 = vadd.f32 %v498, %v702
        %v704 = vpop.f32.mrf.mxu0
        %v705 = vadd.f32 %v498, %v704
        %706 = vmatmul.bf16.gmra.mxu0 %v570
        %v707 = vpop.f32.mrf.mxu0
        %v708 = vadd.f32 %v498, %v707
        %v709 = vpop.f32.mrf.mxu0
        %v710 = vadd.f32 %v498, %v709
        %711 = vmatmul.bf16.gmra.mxu0 %v571
        %v712 = vpop.f32.mrf.mxu0
        %v713 = vadd.f32 %v498, %v712
        %v714 = vpop.f32.mrf.mxu0
        %v715 = vadd.f32 %v498, %v714
        %716 = vmatmul.bf16.gmra.mxu0 %v572
        %v717 = vpop.f32.mrf.mxu0
        %v718 = vadd.f32 %v498, %v717
        %v719 = vpop.f32.mrf.mxu0
        %v720 = vadd.f32 %v498, %v719
        %721 = vmatmul.bf16.gmra.mxu0 %v573
        %v722 = vpop.f32.mrf.mxu0
        %v723 = vadd.f32 %v498, %v722
        %v724 = vpop.f32.mrf.mxu0
        %v725 = vadd.f32 %v498, %v724
        %726 = vmatmul.bf16.gmra.mxu0 %v574
        %v727 = vpop.f32.mrf.mxu0
        %v728 = vadd.f32 %v498, %v727
        %v729 = vpop.f32.mrf.mxu0
        %v730 = vadd.f32 %v498, %v729
        %731 = vmatmul.bf16.gmra.mxu0 %v575
        %v732 = vpop.f32.mrf.mxu0
        %v733 = vadd.f32 %v498, %v732
        %v734 = vpop.f32.mrf.mxu0
        %v735 = vadd.f32 %v498, %v734
        %736 = vmatmul.bf16.gmra.mxu0 %v576
        %v737 = vpop.f32.mrf.mxu0
        %v738 = vadd.f32 %v498, %v737
        %v739 = vpop.f32.mrf.mxu0
        %v740 = vadd.f32 %v498, %v739
        %741 = vmatmul.bf16.gmra.mxu0 %v577
        %v742 = vpop.f32.mrf.mxu0
        %v743 = vadd.f32 %v498, %v742
        %v744 = vpop.f32.mrf.mxu0
        %v745 = vadd.f32 %v498, %v744
        %746 = vmatmul.bf16.gmra.mxu0 %v578
        %v747 = vpop.f32.mrf.mxu0
        %v748 = vadd.f32 %v498, %v747
        %v749 = vpop.f32.mrf.mxu0
        %v750 = vadd.f32 %v498, %v749
        %751 = vmatmul.bf16.gmra.mxu0 %v579
        %v752 = vpop.f32.mrf.mxu0
        %v753 = vadd.f32 %v498, %v752
        %v754 = vpop.f32.mrf.mxu0
        %v755 = vadd.f32 %v498, %v754
        %756 = vmatmul.bf16.gmra.mxu0 %v580
        %v757 = vpop.f32.mrf.mxu0
        %v758 = vadd.f32 %v498, %v757
        %v759 = vpop.f32.mrf.mxu0
        %v760 = vadd.f32 %v498, %v759
        %761 = vmatmul.bf16.gmra.mxu0 %v581
        %v762 = vpop.f32.mrf.mxu0
        %v763 = vadd.f32 %v498, %v762
        %v764 = vpop.f32.mrf.mxu0
        %v765 = vadd.f32 %v498, %v764
        %766 = vdwg.mxu0
        %767 = vmatpush.bf16.msra.mxu0 %v661
        %768 = vmatpush.bf16.msra.mxu0 %v659
        %769 = vmatpush.bf16.msra.mxu0 %v657
        %770 = vmatpush.bf16.msra.mxu0 %v655
        %771 = vmatpush.bf16.msra.mxu0 %v653
        %772 = vmatpush.bf16.msra.mxu0 %v651
        %773 = vmatpush.bf16.msra.mxu0 %v649
        %774 = vmatpush.bf16.msra.mxu0 %v647
        %775 = vmatmul.bf16.gmra.mxu0 %v566
        %v776 = vpop.f32.mrf.mxu0
        %v777 = vadd.f32 %v499, %v776
        %v778 = vpop.f32.mrf.mxu0
        %v779 = vadd.f32 %v499, %v778
        %780 = vmatmul.bf16.gmra.mxu0 %v567
        %v781 = vpop.f32.mrf.mxu0
        %v782 = vadd.f32 %v499, %v781
        %v783 = vpop.f32.mrf.mxu0
        %v784 = vadd.f32 %v499, %v783
        %785 = vmatmul.bf16.gmra.mxu0 %v568
        %v786 = vpop.f32.mrf.mxu0
        %v787 = vadd.f32 %v499, %v786
        %v788 = vpop.f32.mrf.mxu0
        %v789 = vadd.f32 %v499, %v788
        %790 = vmatmul.bf16.gmra.mxu0 %v569
        %v791 = vpop.f32.mrf.mxu0
        %v792 = vadd.f32 %v499, %v791
        %v793 = vpop.f32.mrf.mxu0
        %v794 = vadd.f32 %v499, %v793
        %795 = vmatmul.bf16.gmra.mxu0 %v570
        %v796 = vpop.f32.mrf.mxu0
        %v797 = vadd.f32 %v499, %v796
        %v798 = vpop.f32.mrf.mxu0
        %v799 = vadd.f32 %v499, %v798
        %800 = vmatmul.bf16.gmra.mxu0 %v571
        %v801 = vpop.f32.mrf.mxu0
        %v802 = vadd.f32 %v499, %v801
        %v803 = vpop.f32.mrf.mxu0
        %v804 = vadd.f32 %v499, %v803
        %805 = vmatmul.bf16.gmra.mxu0 %v572
        %v806 = vpop.f32.mrf.mxu0
        %v807 = vadd.f32 %v499, %v806
        %v808 = vpop.f32.mrf.mxu0
        %v809 = vadd.f32 %v499, %v808
        %810 = vmatmul.bf16.gmra.mxu0 %v573
        %v811 = vpop.f32.mrf.mxu0
        %v812 = vadd.f32 %v499, %v811
        %v813 = vpop.f32.mrf.mxu0
        %v814 = vadd.f32 %v499, %v813
        %815 = vmatmul.bf16.gmra.mxu0 %v574
        %v816 = vpop.f32.mrf.mxu0
        %v817 = vadd.f32 %v499, %v816
        %v818 = vpop.f32.mrf.mxu0
        %v819 = vadd.f32 %v499, %v818
        %820 = vmatmul.bf16.gmra.mxu0 %v575
        %v821 = vpop.f32.mrf.mxu0
        %v822 = vadd.f32 %v499, %v821
        %v823 = vpop.f32.mrf.mxu0
        %v824 = vadd.f32 %v499, %v823
        %825 = vmatmul.bf16.gmra.mxu0 %v576
        %v826 = vpop.f32.mrf.mxu0
        %v827 = vadd.f32 %v499, %v826
        %v828 = vpop.f32.mrf.mxu0
        %v829 = vadd.f32 %v499, %v828
        %830 = vmatmul.bf16.gmra.mxu0 %v577
        %v831 = vpop.f32.mrf.mxu0
        %v832 = vadd.f32 %v499, %v831
        %v833 = vpop.f32.mrf.mxu0
        %v834 = vadd.f32 %v499, %v833
        %835 = vmatmul.bf16.gmra.mxu0 %v578
        %v836 = vpop.f32.mrf.mxu0
        %v837 = vadd.f32 %v499, %v836
        %v838 = vpop.f32.mrf.mxu0
        %v839 = vadd.f32 %v499, %v838
        %840 = vmatmul.bf16.gmra.mxu0 %v579
        %v841 = vpop.f32.mrf.mxu0
        %v842 = vadd.f32 %v499, %v841
        %v843 = vpop.f32.mrf.mxu0
        %v844 = vadd.f32 %v499, %v843
        %845 = vmatmul.bf16.gmra.mxu0 %v580
        %v846 = vpop.f32.mrf.mxu0
        %v847 = vadd.f32 %v499, %v846
        %v848 = vpop.f32.mrf.mxu0
        %v849 = vadd.f32 %v499, %v848
        %850 = vmatmul.bf16.gmra.mxu0 %v581
        %v851 = vpop.f32.mrf.mxu0
        %v852 = vadd.f32 %v499, %v851
        %v853 = vpop.f32.mrf.mxu0
        %v854 = vadd.f32 %v499, %v853
        %855 = vdwg.mxu0
        %v856 = vmax.f32 %v688, 0.0
        %v857 = vmax.f32 %v777, 0.0
        %v858 = vmax.f32 %v690, 0.0
        %v859 = vmax.f32 %v779, 0.0
        %v860 = vmax.f32 %v693, 0.0
        %v861 = vmax.f32 %v782, 0.0
        %v862 = vmax.f32 %v695, 0.0
        %v863 = vmax.f32 %v784, 0.0
        %v864 = vmax.f32 %v698, 0.0
        %v865 = vmax.f32 %v787, 0.0
        %v866 = vmax.f32 %v700, 0.0
        %v867 = vmax.f32 %v789, 0.0
        %v868 = vmax.f32 %v703, 0.0
        %v869 = vmax.f32 %v792, 0.0
        %v870 = vmax.f32 %v705, 0.0
        %v871 = vmax.f32 %v794, 0.0
        %v872 = vmax.f32 %v708, 0.0
        %v873 = vmax.f32 %v797, 0.0
        %v874 = vmax.f32 %v710, 0.0
        %v875 = vmax.f32 %v799, 0.0
        %v876 = vmax.f32 %v713, 0.0
        %v877 = vmax.f32 %v802, 0.0
        %v878 = vmax.f32 %v715, 0.0
        %v879 = vmax.f32 %v804, 0.0
        %v880 = vmax.f32 %v718, 0.0
        %v881 = vmax.f32 %v807, 0.0
        %v882 = vmax.f32 %v720, 0.0
        %v883 = vmax.f32 %v809, 0.0
        %v884 = vmax.f32 %v723, 0.0
        %v885 = vmax.f32 %v812, 0.0
        %v886 = vmax.f32 %v725, 0.0
        %v887 = vmax.f32 %v814, 0.0
        %v888 = vmax.f32 %v728, 0.0
        %v889 = vmax.f32 %v817, 0.0
        %v890 = vmax.f32 %v730, 0.0
        %v891 = vmax.f32 %v819, 0.0
        %v892 = vmax.f32 %v733, 0.0
        %v893 = vmax.f32 %v822, 0.0
        %v894 = vmax.f32 %v735, 0.0
        %v895 = vmax.f32 %v824, 0.0
        %v896 = vmax.f32 %v738, 0.0
        %v897 = vmax.f32 %v827, 0.0
        %v898 = vmax.f32 %v740, 0.0
        %v899 = vmax.f32 %v829, 0.0
        %v900 = vmax.f32 %v743, 0.0
        %v901 = vmax.f32 %v832, 0.0
        %v902 = vmax.f32 %v745, 0.0
        %v903 = vmax.f32 %v834, 0.0
        %v904 = vmax.f32 %v748, 0.0
        %v905 = vmax.f32 %v837, 0.0
        %v906 = vmax.f32 %v750, 0.0
        %v907 = vmax.f32 %v839, 0.0
        %v908 = vmax.f32 %v753, 0.0
        %v909 = vmax.f32 %v842, 0.0
        %v910 = vmax.f32 %v755, 0.0
        %v911 = vmax.f32 %v844, 0.0
        %v912 = vmax.f32 %v758, 0.0
        %v913 = vmax.f32 %v847, 0.0
        %v914 = vmax.f32 %v760, 0.0
        %v915 = vmax.f32 %v849, 0.0
        %v916 = vmax.f32 %v763, 0.0
        %v917 = vmax.f32 %v852, 0.0
        %v918 = vmax.f32 %v765, 0.0
        %v919 = vmax.f32 %v854, 0.0
        %v920 = vld [vmem:[#allocation2] sm:$0xff]
        %v921 = vld [vmem:[#allocation2 + $0x8] sm:$0xff]
        %v922 = vld [vmem:[#allocation2 + $0x10] sm:$0xff]
        %v923 = vld [vmem:[#allocation2 + $0x18] sm:$0xff]
        %v924 = vld [vmem:[#allocation2 + $0x20] sm:$0xff]
        %v925 = vld [vmem:[#allocation2 + $0x28] sm:$0xff]
        %v926 = vld [vmem:[#allocation2 + $0x30] sm:$0xff]
        %v927 = vld [vmem:[#allocation2 + $0x38] sm:$0xff]
        %v928 = vld [vmem:[#allocation2 + $0x40] sm:$0xff]
        %v929 = vld [vmem:[#allocation2 + $0x48] sm:$0xff]
        %v930 = vld [vmem:[#allocation2 + $0x50] sm:$0xff]
        %v931 = vld [vmem:[#allocation2 + $0x58] sm:$0xff]
        %v932 = vld [vmem:[#allocation2 + $0x60] sm:$0xff]
        %v933 = vld [vmem:[#allocation2 + $0x68] sm:$0xff]
        %v934 = vld [vmem:[#allocation2 + $0x70] sm:$0xff]
        %v935 = vld [vmem:[#allocation2 + $0x78] sm:$0xff]
        %v936 = vld [vmem:[#allocation2 + $0x80] sm:$0xff]
        %v937 = vld [vmem:[#allocation2 + $0x88] sm:$0xff]
        %v938 = vld [vmem:[#allocation2 + $0x90] sm:$0xff]
        %v939 = vld [vmem:[#allocation2 + $0x98] sm:$0xff]
        %v940 = vld [vmem:[#allocation2 + $0xa0] sm:$0xff]
        %v941 = vld [vmem:[#allocation2 + $0xa8] sm:$0xff]
        %v942 = vld [vmem:[#allocation2 + $0xb0] sm:$0xff]
        %v943 = vld [vmem:[#allocation2 + $0xb8] sm:$0xff]
        %v944 = vld [vmem:[#allocation2 + $0xc0] sm:$0xff]
        %v945 = vld [vmem:[#allocation2 + $0xc8] sm:$0xff]
        %v946 = vld [vmem:[#allocation2 + $0xd0] sm:$0xff]
        %v947 = vld [vmem:[#allocation2 + $0xd8] sm:$0xff]
        %v948 = vld [vmem:[#allocation2 + $0xe0] sm:$0xff]
        %v949 = vld [vmem:[#allocation2 + $0xe8] sm:$0xff]
        %v950 = vld [vmem:[#allocation2 + $0xf0] sm:$0xff]
        %v951 = vld [vmem:[#allocation2 + $0xf8] sm:$0xff]
        %v952 = vpack.c.bf16 %v858, %v856
        %v953 = vpack.c.bf16 %v859, %v857
        %v954 = vpack.c.bf16 %v862, %v860
        %v955 = vpack.c.bf16 %v863, %v861
        %v956 = vpack.c.bf16 %v866, %v864
        %v957 = vpack.c.bf16 %v867, %v865
        %v958 = vpack.c.bf16 %v870, %v868
        %v959 = vpack.c.bf16 %v871, %v869
        %v960 = vpack.c.bf16 %v874, %v872
        %v961 = vpack.c.bf16 %v875, %v873
        %v962 = vpack.c.bf16 %v878, %v876
        %v963 = vpack.c.bf16 %v879, %v877
        %v964 = vpack.c.bf16 %v882, %v880
        %v965 = vpack.c.bf16 %v883, %v881
        %v966 = vpack.c.bf16 %v886, %v884
        %v967 = vpack.c.bf16 %v887, %v885
        %v968 = vpack.c.bf16 %v890, %v888
        %v969 = vpack.c.bf16 %v891, %v889
        %v970 = vpack.c.bf16 %v894, %v892
        %v971 = vpack.c.bf16 %v895, %v893
        %v972 = vpack.c.bf16 %v898, %v896
        %v973 = vpack.c.bf16 %v899, %v897
        %v974 = vpack.c.bf16 %v902, %v900
        %v975 = vpack.c.bf16 %v903, %v901
        %v976 = vpack.c.bf16 %v906, %v904
        %v977 = vpack.c.bf16 %v907, %v905
        %v978 = vpack.c.bf16 %v910, %v908
        %v979 = vpack.c.bf16 %v911, %v909
        %v980 = vpack.c.bf16 %v914, %v912
        %v981 = vpack.c.bf16 %v915, %v913
        %v982 = vpack.c.bf16 %v918, %v916
        %v983 = vpack.c.bf16 %v919, %v917
        %v984 = vld [vmem:[%s370] sm:$0xf]
        %v985 = vld [vmem:[%s370 + $0x4] sm:$0xf]
        %v986 = vld [vmem:[%s370 + $0x8] sm:$0xf]
        %v987 = vld [vmem:[%s370 + $0xc] sm:$0xf]
        %v988 = vld [vmem:[%s370 + $0x10] sm:$0xf]
        %v989 = vld [vmem:[%s370 + $0x14] sm:$0xf]
        %v990 = vld [vmem:[%s370 + $0x18] sm:$0xf]
        %v991 = vld [vmem:[%s370 + $0x1c] sm:$0xf]
        %v992 = vld [vmem:[%s370 + $0x20] sm:$0xf]
        %v993 = vld [vmem:[%s370 + $0x24] sm:$0xf]
        %v994 = vld [vmem:[%s370 + $0x28] sm:$0xf]
        %v995 = vld [vmem:[%s370 + $0x2c] sm:$0xf]
        %v996 = vld [vmem:[%s370 + $0x30] sm:$0xf]
        %v997 = vld [vmem:[%s370 + $0x34] sm:$0xf]
        %v998 = vld [vmem:[%s370 + $0x38] sm:$0xf]
        %v999 = vld [vmem:[%s370 + $0x3c] sm:$0xf]
        %v1000 = vld [vmem:[%s370 + $0x40] sm:$0xf]
        %v1001 = vld [vmem:[%s370 + $0x44] sm:$0xf]
        %v1002 = vld [vmem:[%s370 + $0x48] sm:$0xf]
        %v1003 = vld [vmem:[%s370 + $0x4c] sm:$0xf]
        %v1004 = vld [vmem:[%s370 + $0x50] sm:$0xf]
        %v1005 = vld [vmem:[%s370 + $0x54] sm:$0xf]
        %v1006 = vld [vmem:[%s370 + $0x58] sm:$0xf]
        %v1007 = vld [vmem:[%s370 + $0x5c] sm:$0xf]
        %v1008 = vld [vmem:[%s370 + $0x60] sm:$0xf]
        %v1009 = vld [vmem:[%s370 + $0x64] sm:$0xf]
        %v1010 = vld [vmem:[%s370 + $0x68] sm:$0xf]
        %v1011 = vld [vmem:[%s370 + $0x6c] sm:$0xf]
        %v1012 = vld [vmem:[%s370 + $0x70] sm:$0xf]
        %v1013 = vld [vmem:[%s370 + $0x74] sm:$0xf]
        %v1014 = vld [vmem:[%s370 + $0x78] sm:$0xf]
        %v1015 = vld [vmem:[%s370 + $0x7c] sm:$0xf]
        %v1048 = vunpack.c.l.b16 %v984
        %v1049 = vunpack.c.l.b16 %v985
        %v1050 = vunpack.c.l.b16 %v986
        %v1051 = vunpack.c.l.b16 %v987
        %v1052 = vunpack.c.l.b16 %v988
        %v1053 = vunpack.c.l.b16 %v989
        %v1054 = vunpack.c.l.b16 %v990
        %v1055 = vunpack.c.l.b16 %v991
        %v1056 = vunpack.c.l.b16 %v992
        %v1057 = vunpack.c.l.b16 %v993
        %v1058 = vunpack.c.l.b16 %v994
        %v1059 = vunpack.c.l.b16 %v995
        %v1060 = vunpack.c.l.b16 %v996
        %v1061 = vunpack.c.l.b16 %v997
        %v1062 = vunpack.c.l.b16 %v998
        %v1063 = vunpack.c.l.b16 %v999
        %v1064 = vunpack.c.l.b16 %v1000
        %v1065 = vunpack.c.l.b16 %v1001
        %v1066 = vunpack.c.l.b16 %v1002
        %v1067 = vunpack.c.l.b16 %v1003
        %v1068 = vunpack.c.l.b16 %v1004
        %v1069 = vunpack.c.l.b16 %v1005
        %v1070 = vunpack.c.l.b16 %v1006
        %v1071 = vunpack.c.l.b16 %v1007
        %v1072 = vunpack.c.l.b16 %v1008
        %v1073 = vunpack.c.l.b16 %v1009
        %v1074 = vunpack.c.l.b16 %v1010
        %v1075 = vunpack.c.l.b16 %v1011
        %v1076 = vunpack.c.l.b16 %v1012
        %v1077 = vunpack.c.l.b16 %v1013
        %v1078 = vunpack.c.l.b16 %v1014
        %v1079 = vunpack.c.l.b16 %v1015
        %v1080 = vpack.c.b16 %v1049, %v1048
        %v1081 = vpack.c.b16 %v1051, %v1050
        %v1082 = vpack.c.b16 %v1053, %v1052
        %v1083 = vpack.c.b16 %v1055, %v1054
        %v1084 = vpack.c.b16 %v1057, %v1056
        %v1085 = vpack.c.b16 %v1059, %v1058
        %v1086 = vpack.c.b16 %v1061, %v1060
        %v1087 = vpack.c.b16 %v1063, %v1062
        %v1088 = vpack.c.b16 %v1065, %v1064
        %v1089 = vpack.c.b16 %v1067, %v1066
        %v1090 = vpack.c.b16 %v1069, %v1068
        %v1091 = vpack.c.b16 %v1071, %v1070
        %v1092 = vpack.c.b16 %v1073, %v1072
        %v1093 = vpack.c.b16 %v1075, %v1074
        %v1094 = vpack.c.b16 %v1077, %v1076
        %v1095 = vpack.c.b16 %v1079, %v1078
        %1112 = vmatpush.bf16.msra.mxu0 %v1087
        %1113 = vmatpush.bf16.msra.mxu0 %v1086
        %1114 = vmatpush.bf16.msra.mxu0 %v1085
        %1115 = vmatpush.bf16.msra.mxu0 %v1084
        %1116 = vmatpush.bf16.msra.mxu0 %v1083
        %1117 = vmatpush.bf16.msra.mxu0 %v1082
        %1118 = vmatpush.bf16.msra.mxu0 %v1081
        %1119 = vmatpush.bf16.msra.mxu0 %v1080
        %1120 = vmatmul.bf16.gmra.mxu0 %v952
        %v1121 = vpop.f32.mrf.mxu0
        %v1122 = vadd.f32 0.0, %v1121
        %v1123 = vpop.f32.mrf.mxu0
        %v1124 = vadd.f32 0.0, %v1123
        %1125 = vmatmul.bf16.gmra.mxu0 %v954
        %v1126 = vpop.f32.mrf.mxu0
        %v1127 = vadd.f32 0.0, %v1126
        %v1128 = vpop.f32.mrf.mxu0
        %v1129 = vadd.f32 0.0, %v1128
        %1130 = vmatmul.bf16.gmra.mxu0 %v956
        %v1131 = vpop.f32.mrf.mxu0
        %v1132 = vadd.f32 0.0, %v1131
        %v1133 = vpop.f32.mrf.mxu0
        %v1134 = vadd.f32 0.0, %v1133
        %1135 = vmatmul.bf16.gmra.mxu0 %v958
        %v1136 = vpop.f32.mrf.mxu0
        %v1137 = vadd.f32 0.0, %v1136
        %v1138 = vpop.f32.mrf.mxu0
        %v1139 = vadd.f32 0.0, %v1138
        %1140 = vmatmul.bf16.gmra.mxu0 %v960
        %v1141 = vpop.f32.mrf.mxu0
        %v1142 = vadd.f32 0.0, %v1141
        %v1143 = vpop.f32.mrf.mxu0
        %v1144 = vadd.f32 0.0, %v1143
        %1145 = vmatmul.bf16.gmra.mxu0 %v962
        %v1146 = vpop.f32.mrf.mxu0
        %v1147 = vadd.f32 0.0, %v1146
        %v1148 = vpop.f32.mrf.mxu0
        %v1149 = vadd.f32 0.0, %v1148
        %1150 = vmatmul.bf16.gmra.mxu0 %v964
        %v1151 = vpop.f32.mrf.mxu0
        %v1152 = vadd.f32 0.0, %v1151
        %v1153 = vpop.f32.mrf.mxu0
        %v1154 = vadd.f32 0.0, %v1153
        %1155 = vmatmul.bf16.gmra.mxu0 %v966
        %v1156 = vpop.f32.mrf.mxu0
        %v1157 = vadd.f32 0.0, %v1156
        %v1158 = vpop.f32.mrf.mxu0
        %v1159 = vadd.f32 0.0, %v1158
        %1160 = vmatmul.bf16.gmra.mxu0 %v968
        %v1161 = vpop.f32.mrf.mxu0
        %v1162 = vadd.f32 0.0, %v1161
        %v1163 = vpop.f32.mrf.mxu0
        %v1164 = vadd.f32 0.0, %v1163
        %1165 = vmatmul.bf16.gmra.mxu0 %v970
        %v1166 = vpop.f32.mrf.mxu0
        %v1167 = vadd.f32 0.0, %v1166
        %v1168 = vpop.f32.mrf.mxu0
        %v1169 = vadd.f32 0.0, %v1168
        %1170 = vmatmul.bf16.gmra.mxu0 %v972
        %v1171 = vpop.f32.mrf.mxu0
        %v1172 = vadd.f32 0.0, %v1171
        %v1173 = vpop.f32.mrf.mxu0
        %v1174 = vadd.f32 0.0, %v1173
        %1175 = vmatmul.bf16.gmra.mxu0 %v974
        %v1176 = vpop.f32.mrf.mxu0
        %v1177 = vadd.f32 0.0, %v1176
        %v1178 = vpop.f32.mrf.mxu0
        %v1179 = vadd.f32 0.0, %v1178
        %1180 = vmatmul.bf16.gmra.mxu0 %v976
        %v1181 = vpop.f32.mrf.mxu0
        %v1182 = vadd.f32 0.0, %v1181
        %v1183 = vpop.f32.mrf.mxu0
        %v1184 = vadd.f32 0.0, %v1183
        %1185 = vmatmul.bf16.gmra.mxu0 %v978
        %v1186 = vpop.f32.mrf.mxu0
        %v1187 = vadd.f32 0.0, %v1186
        %v1188 = vpop.f32.mrf.mxu0
        %v1189 = vadd.f32 0.0, %v1188
        %1190 = vmatmul.bf16.gmra.mxu0 %v980
        %v1191 = vpop.f32.mrf.mxu0
        %v1192 = vadd.f32 0.0, %v1191
        %v1193 = vpop.f32.mrf.mxu0
        %v1194 = vadd.f32 0.0, %v1193
        %1195 = vmatmul.bf16.gmra.mxu0 %v982
        %v1196 = vpop.f32.mrf.mxu0
        %v1197 = vadd.f32 0.0, %v1196
        %v1198 = vpop.f32.mrf.mxu0
        %v1199 = vadd.f32 0.0, %v1198
        %1200 = vdwg.mxu0
        %1201 = vmatpush.bf16.msra.mxu0 %v1095
        %1202 = vmatpush.bf16.msra.mxu0 %v1094
        %1203 = vmatpush.bf16.msra.mxu0 %v1093
        %1204 = vmatpush.bf16.msra.mxu0 %v1092
        %1205 = vmatpush.bf16.msra.mxu0 %v1091
        %1206 = vmatpush.bf16.msra.mxu0 %v1090
        %1207 = vmatpush.bf16.msra.mxu0 %v1089
        %1208 = vmatpush.bf16.msra.mxu0 %v1088
        %1209 = vmatmul.bf16.gmra.mxu0 %v953
        %v1210 = vpop.f32.mrf.mxu0
        %v1211 = vadd.f32 %v1122, %v1210
        %v1212 = vpop.f32.mrf.mxu0
        %v1213 = vadd.f32 %v1124, %v1212
        %1214 = vmatmul.bf16.gmra.mxu0 %v955
        %v1215 = vpop.f32.mrf.mxu0
        %v1216 = vadd.f32 %v1127, %v1215
        %v1217 = vpop.f32.mrf.mxu0
        %v1218 = vadd.f32 %v1129, %v1217
        %1219 = vmatmul.bf16.gmra.mxu0 %v957
        %v1220 = vpop.f32.mrf.mxu0
        %v1221 = vadd.f32 %v1132, %v1220
        %v1222 = vpop.f32.mrf.mxu0
        %v1223 = vadd.f32 %v1134, %v1222
        %1224 = vmatmul.bf16.gmra.mxu0 %v959
        %v1225 = vpop.f32.mrf.mxu0
        %v1226 = vadd.f32 %v1137, %v1225
        %v1227 = vpop.f32.mrf.mxu0
        %v1228 = vadd.f32 %v1139, %v1227
        %1229 = vmatmul.bf16.gmra.mxu0 %v961
        %v1230 = vpop.f32.mrf.mxu0
        %v1231 = vadd.f32 %v1142, %v1230
        %v1232 = vpop.f32.mrf.mxu0
        %v1233 = vadd.f32 %v1144, %v1232
        %1234 = vmatmul.bf16.gmra.mxu0 %v963
        %v1235 = vpop.f32.mrf.mxu0
        %v1236 = vadd.f32 %v1147, %v1235
        %v1237 = vpop.f32.mrf.mxu0
        %v1238 = vadd.f32 %v1149, %v1237
        %1239 = vmatmul.bf16.gmra.mxu0 %v965
        %v1240 = vpop.f32.mrf.mxu0
        %v1241 = vadd.f32 %v1152, %v1240
        %v1242 = vpop.f32.mrf.mxu0
        %v1243 = vadd.f32 %v1154, %v1242
        %1244 = vmatmul.bf16.gmra.mxu0 %v967
        %v1245 = vpop.f32.mrf.mxu0
        %v1246 = vadd.f32 %v1157, %v1245
        %v1247 = vpop.f32.mrf.mxu0
        %v1248 = vadd.f32 %v1159, %v1247
        %1249 = vmatmul.bf16.gmra.mxu0 %v969
        %v1250 = vpop.f32.mrf.mxu0
        %v1251 = vadd.f32 %v1162, %v1250
        %v1252 = vpop.f32.mrf.mxu0
        %v1253 = vadd.f32 %v1164, %v1252
        %1254 = vmatmul.bf16.gmra.mxu0 %v971
        %v1255 = vpop.f32.mrf.mxu0
        %v1256 = vadd.f32 %v1167, %v1255
        %v1257 = vpop.f32.mrf.mxu0
        %v1258 = vadd.f32 %v1169, %v1257
        %1259 = vmatmul.bf16.gmra.mxu0 %v973
        %v1260 = vpop.f32.mrf.mxu0
        %v1261 = vadd.f32 %v1172, %v1260
        %v1262 = vpop.f32.mrf.mxu0
        %v1263 = vadd.f32 %v1174, %v1262
        %1264 = vmatmul.bf16.gmra.mxu0 %v975
        %v1265 = vpop.f32.mrf.mxu0
        %v1266 = vadd.f32 %v1177, %v1265
        %v1267 = vpop.f32.mrf.mxu0
        %v1268 = vadd.f32 %v1179, %v1267
        %1269 = vmatmul.bf16.gmra.mxu0 %v977
        %v1270 = vpop.f32.mrf.mxu0
        %v1271 = vadd.f32 %v1182, %v1270
        %v1272 = vpop.f32.mrf.mxu0
        %v1273 = vadd.f32 %v1184, %v1272
        %1274 = vmatmul.bf16.gmra.mxu0 %v979
        %v1275 = vpop.f32.mrf.mxu0
        %v1276 = vadd.f32 %v1187, %v1275
        %v1277 = vpop.f32.mrf.mxu0
        %v1278 = vadd.f32 %v1189, %v1277
        %1279 = vmatmul.bf16.gmra.mxu0 %v981
        %v1280 = vpop.f32.mrf.mxu0
        %v1281 = vadd.f32 %v1192, %v1280
        %v1282 = vpop.f32.mrf.mxu0
        %v1283 = vadd.f32 %v1194, %v1282
        %1284 = vmatmul.bf16.gmra.mxu0 %v983
        %v1285 = vpop.f32.mrf.mxu0
        %v1286 = vadd.f32 %v1197, %v1285
        %v1287 = vpop.f32.mrf.mxu0
        %v1288 = vadd.f32 %v1199, %v1287
        %1289 = vdwg.mxu0
        %v1290 = vadd.f32 %v920, %v1211
        %v1291 = vadd.f32 %v921, %v1213
        %v1292 = vadd.f32 %v922, %v1216
        %v1293 = vadd.f32 %v923, %v1218
        %v1294 = vadd.f32 %v924, %v1221
        %v1295 = vadd.f32 %v925, %v1223
        %v1296 = vadd.f32 %v926, %v1226
        %v1297 = vadd.f32 %v927, %v1228
        %v1298 = vadd.f32 %v928, %v1231
        %v1299 = vadd.f32 %v929, %v1233
        %v1300 = vadd.f32 %v930, %v1236
        %v1301 = vadd.f32 %v931, %v1238
        %v1302 = vadd.f32 %v932, %v1241
        %v1303 = vadd.f32 %v933, %v1243
        %v1304 = vadd.f32 %v934, %v1246
        %v1305 = vadd.f32 %v935, %v1248
        %v1306 = vadd.f32 %v936, %v1251
        %v1307 = vadd.f32 %v937, %v1253
        %v1308 = vadd.f32 %v938, %v1256
        %v1309 = vadd.f32 %v939, %v1258
        %v1310 = vadd.f32 %v940, %v1261
        %v1311 = vadd.f32 %v941, %v1263
        %v1312 = vadd.f32 %v942, %v1266
        %v1313 = vadd.f32 %v943, %v1268
        %v1314 = vadd.f32 %v944, %v1271
        %v1315 = vadd.f32 %v945, %v1273
        %v1316 = vadd.f32 %v946, %v1276
        %v1317 = vadd.f32 %v947, %v1278
        %v1318 = vadd.f32 %v948, %v1281
        %v1319 = vadd.f32 %v949, %v1283
        %v1320 = vadd.f32 %v950, %v1286
        %v1321 = vadd.f32 %v951, %v1288
        %1322 = vst [vmem:[#allocation2] sm:$0xff] %v1290
        %1323 = vst [vmem:[#allocation2 + $0x8] sm:$0xff] %v1291
        %1324 = vst [vmem:[#allocation2 + $0x10] sm:$0xff] %v1292
        %1325 = vst [vmem:[#allocation2 + $0x18] sm:$0xff] %v1293
        %1326 = vst [vmem:[#allocation2 + $0x20] sm:$0xff] %v1294
        %1327 = vst [vmem:[#allocation2 + $0x28] sm:$0xff] %v1295
        %1328 = vst [vmem:[#allocation2 + $0x30] sm:$0xff] %v1296
        %1329 = vst [vmem:[#allocation2 + $0x38] sm:$0xff] %v1297
        %1330 = vst [vmem:[#allocation2 + $0x40] sm:$0xff] %v1298
        %1331 = vst [vmem:[#allocation2 + $0x48] sm:$0xff] %v1299
        %1332 = vst [vmem:[#allocation2 + $0x50] sm:$0xff] %v1300
        %1333 = vst [vmem:[#allocation2 + $0x58] sm:$0xff] %v1301
        %1334 = vst [vmem:[#allocation2 + $0x60] sm:$0xff] %v1302
        %1335 = vst [vmem:[#allocation2 + $0x68] sm:$0xff] %v1303
        %1336 = vst [vmem:[#allocation2 + $0x70] sm:$0xff] %v1304
        %1337 = vst [vmem:[#allocation2 + $0x78] sm:$0xff] %v1305
        %1338 = vst [vmem:[#allocation2 + $0x80] sm:$0xff] %v1306
        %1339 = vst [vmem:[#allocation2 + $0x88] sm:$0xff] %v1307
        %1340 = vst [vmem:[#allocation2 + $0x90] sm:$0xff] %v1308
        %1341 = vst [vmem:[#allocation2 + $0x98] sm:$0xff] %v1309
        %1342 = vst [vmem:[#allocation2 + $0xa0] sm:$0xff] %v1310
        %1343 = vst [vmem:[#allocation2 + $0xa8] sm:$0xff] %v1311
        %1344 = vst [vmem:[#allocation2 + $0xb0] sm:$0xff] %v1312
        %1345 = vst [vmem:[#allocation2 + $0xb8] sm:$0xff] %v1313
        %1346 = vst [vmem:[#allocation2 + $0xc0] sm:$0xff] %v1314
        %1347 = vst [vmem:[#allocation2 + $0xc8] sm:$0xff] %v1315
        %1348 = vst [vmem:[#allocation2 + $0xd0] sm:$0xff] %v1316
        %1349 = vst [vmem:[#allocation2 + $0xd8] sm:$0xff] %v1317
        %1350 = vst [vmem:[#allocation2 + $0xe0] sm:$0xff] %v1318
        %1351 = vst [vmem:[#allocation2 + $0xe8] sm:$0xff] %v1319
        %1352 = vst [vmem:[#allocation2 + $0xf0] sm:$0xff] %v1320
        %1353 = vst [vmem:[#allocation2 + $0xf8] sm:$0xff] %v1321
        %p1354 = scmp.eq.s32.totalorder %s31, 1
        // Predicated region
        $region69: #{tpu_custom_call.1} parent=47 // pred_check
          %p1355 = pneg %p1354
        $region70: #{tpu_custom_call.1} parent=47 // pred_check_branch
          %1357 = sbr.rel (%p1355) target = $region72
        $region71: #{tpu_custom_call.1} parent=47 // pred_region
          %v1358 = vunpack.c.l.bf16 %v448
          %v1359 = vunpack.c.l.bf16 %v449
          %v1360 = vunpack.c.l.bf16 %v450
          %v1361 = vunpack.c.l.bf16 %v451
          %v1362 = vunpack.c.l.bf16 %v452
          %v1363 = vunpack.c.l.bf16 %v453
          %v1364 = vunpack.c.l.bf16 %v454
          %v1365 = vunpack.c.l.bf16 %v455
          %v1366 = vunpack.c.l.bf16 %v456
          %v1367 = vunpack.c.l.bf16 %v457
          %v1368 = vunpack.c.l.bf16 %v458
          %v1369 = vunpack.c.l.bf16 %v459
          %v1370 = vunpack.c.l.bf16 %v460
          %v1371 = vunpack.c.l.bf16 %v461
          %v1372 = vunpack.c.l.bf16 %v462
          %v1373 = vunpack.c.l.bf16 %v463
          %v1374 = vunpack.c.l.bf16 %v464
          %v1375 = vunpack.c.l.bf16 %v465
          %v1376 = vunpack.c.l.bf16 %v466
          %v1377 = vunpack.c.l.bf16 %v467
          %v1378 = vunpack.c.l.bf16 %v468
          %v1379 = vunpack.c.l.bf16 %v469
          %v1380 = vunpack.c.l.bf16 %v470
          %v1381 = vunpack.c.l.bf16 %v471
          %v1382 = vunpack.c.l.bf16 %v472
          %v1383 = vunpack.c.l.bf16 %v473
          %v1384 = vunpack.c.l.bf16 %v474
          %v1385 = vunpack.c.l.bf16 %v475
          %v1386 = vunpack.c.l.bf16 %v476
          %v1387 = vunpack.c.l.bf16 %v477
          %v1388 = vunpack.c.l.bf16 %v478
          %v1389 = vunpack.c.l.bf16 %v479
          %v1390 = vld [vmem:[#allocation2] sm:$0xff]
          %v1391 = vld [vmem:[#allocation2 + $0x8] sm:$0xff]
          %v1392 = vld [vmem:[#allocation2 + $0x10] sm:$0xff]
          %v1393 = vld [vmem:[#allocation2 + $0x18] sm:$0xff]
          %v1394 = vld [vmem:[#allocation2 + $0x20] sm:$0xff]
          %v1395 = vld [vmem:[#allocation2 + $0x28] sm:$0xff]
          %v1396 = vld [vmem:[#allocation2 + $0x30] sm:$0xff]
          %v1397 = vld [vmem:[#allocation2 + $0x38] sm:$0xff]
          %v1398 = vld [vmem:[#allocation2 + $0x40] sm:$0xff]
          %v1399 = vld [vmem:[#allocation2 + $0x48] sm:$0xff]
          %v1400 = vld [vmem:[#allocation2 + $0x50] sm:$0xff]
          %v1401 = vld [vmem:[#allocation2 + $0x58] sm:$0xff]
          %v1402 = vld [vmem:[#allocation2 + $0x60] sm:$0xff]
          %v1403 = vld [vmem:[#allocation2 + $0x68] sm:$0xff]
          %v1404 = vld [vmem:[#allocation2 + $0x70] sm:$0xff]
          %v1405 = vld [vmem:[#allocation2 + $0x78] sm:$0xff]
          %v1406 = vld [vmem:[#allocation2 + $0x80] sm:$0xff]
          %v1407 = vld [vmem:[#allocation2 + $0x88] sm:$0xff]
          %v1408 = vld [vmem:[#allocation2 + $0x90] sm:$0xff]
          %v1409 = vld [vmem:[#allocation2 + $0x98] sm:$0xff]
          %v1410 = vld [vmem:[#allocation2 + $0xa0] sm:$0xff]
          %v1411 = vld [vmem:[#allocation2 + $0xa8] sm:$0xff]
          %v1412 = vld [vmem:[#allocation2 + $0xb0] sm:$0xff]
          %v1413 = vld [vmem:[#allocation2 + $0xb8] sm:$0xff]
          %v1414 = vld [vmem:[#allocation2 + $0xc0] sm:$0xff]
          %v1415 = vld [vmem:[#allocation2 + $0xc8] sm:$0xff]
          %v1416 = vld [vmem:[#allocation2 + $0xd0] sm:$0xff]
          %v1417 = vld [vmem:[#allocation2 + $0xd8] sm:$0xff]
          %v1418 = vld [vmem:[#allocation2 + $0xe0] sm:$0xff]
          %v1419 = vld [vmem:[#allocation2 + $0xe8] sm:$0xff]
          %v1420 = vld [vmem:[#allocation2 + $0xf0] sm:$0xff]
          %v1421 = vld [vmem:[#allocation2 + $0xf8] sm:$0xff]
          %v1422 = vadd.f32 %v1358, %v1390
          %v1423 = vadd.f32 %v1359, %v1391
          %v1424 = vadd.f32 %v1360, %v1392
          %v1425 = vadd.f32 %v1361, %v1393
          %v1426 = vadd.f32 %v1362, %v1394
          %v1427 = vadd.f32 %v1363, %v1395
          %v1428 = vadd.f32 %v1364, %v1396
          %v1429 = vadd.f32 %v1365, %v1397
          %v1430 = vadd.f32 %v1366, %v1398
          %v1431 = vadd.f32 %v1367, %v1399
          %v1432 = vadd.f32 %v1368, %v1400
          %v1433 = vadd.f32 %v1369, %v1401
          %v1434 = vadd.f32 %v1370, %v1402
          %v1435 = vadd.f32 %v1371, %v1403
          %v1436 = vadd.f32 %v1372, %v1404
          %v1437 = vadd.f32 %v1373, %v1405
          %v1438 = vadd.f32 %v1374, %v1406
          %v1439 = vadd.f32 %v1375, %v1407
          %v1440 = vadd.f32 %v1376, %v1408
          %v1441 = vadd.f32 %v1377, %v1409
          %v1442 = vadd.f32 %v1378, %v1410
          %v1443 = vadd.f32 %v1379, %v1411
          %v1444 = vadd.f32 %v1380, %v1412
          %v1445 = vadd.f32 %v1381, %v1413
          %v1446 = vadd.f32 %v1382, %v1414
          %v1447 = vadd.f32 %v1383, %v1415
          %v1448 = vadd.f32 %v1384, %v1416
          %v1449 = vadd.f32 %v1385, %v1417
          %v1450 = vadd.f32 %v1386, %v1418
          %v1451 = vadd.f32 %v1387, %v1419
          %v1452 = vadd.f32 %v1388, %v1420
          %v1453 = vadd.f32 %v1389, %v1421
          %v1454 = vld [vmem:[%s4] sm:$0x1]
          %v1456 = vperm.slane %v1454, 0
          %v1458 = vadd.f32 %v1422, %v1456
          %v1459 = vadd.f32 %v1423, %v1456
          %v1460 = vadd.f32 %v1424, %v1456
          %v1461 = vadd.f32 %v1425, %v1456
          %v1462 = vadd.f32 %v1426, %v1456
          %v1463 = vadd.f32 %v1427, %v1456
          %v1464 = vadd.f32 %v1428, %v1456
          %v1465 = vadd.f32 %v1429, %v1456
          %v1466 = vadd.f32 %v1430, %v1456
          %v1467 = vadd.f32 %v1431, %v1456
          %v1468 = vadd.f32 %v1432, %v1456
          %v1469 = vadd.f32 %v1433, %v1456
          %v1470 = vadd.f32 %v1434, %v1456
          %v1471 = vadd.f32 %v1435, %v1456
          %v1472 = vadd.f32 %v1436, %v1456
          %v1473 = vadd.f32 %v1437, %v1456
          %v1474 = vadd.f32 %v1438, %v1456
          %v1475 = vadd.f32 %v1439, %v1456
          %v1476 = vadd.f32 %v1440, %v1456
          %v1477 = vadd.f32 %v1441, %v1456
          %v1478 = vadd.f32 %v1442, %v1456
          %v1479 = vadd.f32 %v1443, %v1456
          %v1480 = vadd.f32 %v1444, %v1456
          %v1481 = vadd.f32 %v1445, %v1456
          %v1482 = vadd.f32 %v1446, %v1456
          %v1483 = vadd.f32 %v1447, %v1456
          %v1484 = vadd.f32 %v1448, %v1456
          %v1485 = vadd.f32 %v1449, %v1456
          %v1486 = vadd.f32 %v1450, %v1456
          %v1487 = vadd.f32 %v1451, %v1456
          %v1488 = vadd.f32 %v1452, %v1456
          %v1489 = vadd.f32 %v1453, %v1456
          %1490 = vadd.xlane.f32.xlu0 %v1458
          %v1491 = vpop.xlane.xlu0 %1490
          %1492 = vadd.xlane.f32.xlu0 %v1459
          %v1493 = vpop.xlane.xlu0 %1492
          %1494 = vadd.xlane.f32.xlu0 %v1460
          %v1495 = vpop.xlane.xlu0 %1494
          %1496 = vadd.xlane.f32.xlu0 %v1461
          %v1497 = vpop.xlane.xlu0 %1496
          %1498 = vadd.xlane.f32.xlu0 %v1462
          %v1499 = vpop.xlane.xlu0 %1498
          %1500 = vadd.xlane.f32.xlu0 %v1463
          %v1501 = vpop.xlane.xlu0 %1500
          %1502 = vadd.xlane.f32.xlu0 %v1464
          %v1503 = vpop.xlane.xlu0 %1502
          %1504 = vadd.xlane.f32.xlu0 %v1465
          %v1505 = vpop.xlane.xlu0 %1504
          %1506 = vadd.xlane.f32.xlu0 %v1466
          %v1507 = vpop.xlane.xlu0 %1506
          %1508 = vadd.xlane.f32.xlu0 %v1467
          %v1509 = vpop.xlane.xlu0 %1508
          %1510 = vadd.xlane.f32.xlu0 %v1468
          %v1511 = vpop.xlane.xlu0 %1510
          %1512 = vadd.xlane.f32.xlu0 %v1469
          %v1513 = vpop.xlane.xlu0 %1512
          %1514 = vadd.xlane.f32.xlu0 %v1470
          %v1515 = vpop.xlane.xlu0 %1514
          %1516 = vadd.xlane.f32.xlu0 %v1471
          %v1517 = vpop.xlane.xlu0 %1516
          %1518 = vadd.xlane.f32.xlu0 %v1472
          %v1519 = vpop.xlane.xlu0 %1518
          %1520 = vadd.xlane.f32.xlu0 %v1473
          %v1521 = vpop.xlane.xlu0 %1520
          %1522 = vadd.xlane.f32.xlu0 %v1474
          %v1523 = vpop.xlane.xlu0 %1522
          %1524 = vadd.xlane.f32.xlu0 %v1475
          %v1525 = vpop.xlane.xlu0 %1524
          %1526 = vadd.xlane.f32.xlu0 %v1476
          %v1527 = vpop.xlane.xlu0 %1526
          %1528 = vadd.xlane.f32.xlu0 %v1477
          %v1529 = vpop.xlane.xlu0 %1528
          %1530 = vadd.xlane.f32.xlu0 %v1478
          %v1531 = vpop.xlane.xlu0 %1530
          %1532 = vadd.xlane.f32.xlu0 %v1479
          %v1533 = vpop.xlane.xlu0 %1532
          %1534 = vadd.xlane.f32.xlu0 %v1480
          %v1535 = vpop.xlane.xlu0 %1534
          %1536 = vadd.xlane.f32.xlu0 %v1481
          %v1537 = vpop.xlane.xlu0 %1536
          %1538 = vadd.xlane.f32.xlu0 %v1482
          %v1539 = vpop.xlane.xlu0 %1538
          %1540 = vadd.xlane.f32.xlu0 %v1483
          %v1541 = vpop.xlane.xlu0 %1540
          %1542 = vadd.xlane.f32.xlu0 %v1484
          %v1543 = vpop.xlane.xlu0 %1542
          %1544 = vadd.xlane.f32.xlu0 %v1485
          %v1545 = vpop.xlane.xlu0 %1544
          %1546 = vadd.xlane.f32.xlu0 %v1486
          %v1547 = vpop.xlane.xlu0 %1546
          %1548 = vadd.xlane.f32.xlu0 %v1487
          %v1549 = vpop.xlane.xlu0 %1548
          %1550 = vadd.xlane.f32.xlu0 %v1488
          %v1551 = vpop.xlane.xlu0 %1550
          %1552 = vadd.xlane.f32.xlu0 %v1489
          %v1553 = vpop.xlane.xlu0 %1552
          %v1554 = vrcp.pop 128.0
          %v1555 = vmul.f32 128.0, %v1554
          %v1556 = vsub.f32 1.0, %v1555
          %v1557 = vmul.f32 %v1554, %v1556
          %v1558 = vadd.f32 %v1554, %v1557
          %vm1559 = vweird.f32 %v1554
          %v1560 = vsel %vm1559, %v1554, %v1558
          %v1561 = vmul.f32 %v1491, %v1560
          %v1562 = vmul.f32 %v1493, %v1560
          %v1563 = vmul.f32 %v1495, %v1560
          %v1564 = vmul.f32 %v1497, %v1560
          %v1565 = vmul.f32 %v1499, %v1560
          %v1566 = vmul.f32 %v1501, %v1560
          %v1567 = vmul.f32 %v1503, %v1560
          %v1568 = vmul.f32 %v1505, %v1560
          %v1569 = vmul.f32 %v1507, %v1560
          %v1570 = vmul.f32 %v1509, %v1560
          %v1571 = vmul.f32 %v1511, %v1560
          %v1572 = vmul.f32 %v1513, %v1560
          %v1573 = vmul.f32 %v1515, %v1560
          %v1574 = vmul.f32 %v1517, %v1560
          %v1575 = vmul.f32 %v1519, %v1560
          %v1576 = vmul.f32 %v1521, %v1560
          %v1577 = vmul.f32 %v1523, %v1560
          %v1578 = vmul.f32 %v1525, %v1560
          %v1579 = vmul.f32 %v1527, %v1560
          %v1580 = vmul.f32 %v1529, %v1560
          %v1581 = vmul.f32 %v1531, %v1560
          %v1582 = vmul.f32 %v1533, %v1560
          %v1583 = vmul.f32 %v1535, %v1560
          %v1584 = vmul.f32 %v1537, %v1560
          %v1585 = vmul.f32 %v1539, %v1560
          %v1586 = vmul.f32 %v1541, %v1560
          %v1587 = vmul.f32 %v1543, %v1560
          %v1588 = vmul.f32 %v1545, %v1560
          %v1589 = vmul.f32 %v1547, %v1560
          %v1590 = vmul.f32 %v1549, %v1560
          %v1591 = vmul.f32 %v1551, %v1560
          %v1592 = vmul.f32 %v1553, %v1560
          %v1593 = vsub.f32 %v1458, %v1561
          %v1594 = vsub.f32 %v1459, %v1562
          %v1595 = vsub.f32 %v1460, %v1563
          %v1596 = vsub.f32 %v1461, %v1564
          %v1597 = vsub.f32 %v1462, %v1565
          %v1598 = vsub.f32 %v1463, %v1566
          %v1599 = vsub.f32 %v1464, %v1567
          %v1600 = vsub.f32 %v1465, %v1568
          %v1601 = vsub.f32 %v1466, %v1569
          %v1602 = vsub.f32 %v1467, %v1570
          %v1603 = vsub.f32 %v1468, %v1571
          %v1604 = vsub.f32 %v1469, %v1572
          %v1605 = vsub.f32 %v1470, %v1573
          %v1606 = vsub.f32 %v1471, %v1574
          %v1607 = vsub.f32 %v1472, %v1575
          %v1608 = vsub.f32 %v1473, %v1576
          %v1609 = vsub.f32 %v1474, %v1577
          %v1610 = vsub.f32 %v1475, %v1578
          %v1611 = vsub.f32 %v1476, %v1579
          %v1612 = vsub.f32 %v1477, %v1580
          %v1613 = vsub.f32 %v1478, %v1581
          %v1614 = vsub.f32 %v1479, %v1582
          %v1615 = vsub.f32 %v1480, %v1583
          %v1616 = vsub.f32 %v1481, %v1584
          %v1617 = vsub.f32 %v1482, %v1585
          %v1618 = vsub.f32 %v1483, %v1586
          %v1619 = vsub.f32 %v1484, %v1587
          %v1620 = vsub.f32 %v1485, %v1588
          %v1621 = vsub.f32 %v1486, %v1589
          %v1622 = vsub.f32 %v1487, %v1590
          %v1623 = vsub.f32 %v1488, %v1591
          %v1624 = vsub.f32 %v1489, %v1592
          %v1625 = vmul.f32 %v1593, %v1593
          %v1626 = vmul.f32 %v1594, %v1594
          %v1627 = vmul.f32 %v1595, %v1595
          %v1628 = vmul.f32 %v1596, %v1596
          %v1629 = vmul.f32 %v1597, %v1597
          %v1630 = vmul.f32 %v1598, %v1598
          %v1631 = vmul.f32 %v1599, %v1599
          %v1632 = vmul.f32 %v1600, %v1600
          %v1633 = vmul.f32 %v1601, %v1601
          %v1634 = vmul.f32 %v1602, %v1602
          %v1635 = vmul.f32 %v1603, %v1603
          %v1636 = vmul.f32 %v1604, %v1604
          %v1637 = vmul.f32 %v1605, %v1605
          %v1638 = vmul.f32 %v1606, %v1606
          %v1639 = vmul.f32 %v1607, %v1607
          %v1640 = vmul.f32 %v1608, %v1608
          %v1641 = vmul.f32 %v1609, %v1609
          %v1642 = vmul.f32 %v1610, %v1610
          %v1643 = vmul.f32 %v1611, %v1611
          %v1644 = vmul.f32 %v1612, %v1612
          %v1645 = vmul.f32 %v1613, %v1613
          %v1646 = vmul.f32 %v1614, %v1614
          %v1647 = vmul.f32 %v1615, %v1615
          %v1648 = vmul.f32 %v1616, %v1616
          %v1649 = vmul.f32 %v1617, %v1617
          %v1650 = vmul.f32 %v1618, %v1618
          %v1651 = vmul.f32 %v1619, %v1619
          %v1652 = vmul.f32 %v1620, %v1620
          %v1653 = vmul.f32 %v1621, %v1621
          %v1654 = vmul.f32 %v1622, %v1622
          %v1655 = vmul.f32 %v1623, %v1623
          %v1656 = vmul.f32 %v1624, %v1624
          %1657 = vadd.xlane.f32.xlu0 %v1625
          %v1658 = vpop.xlane.xlu0 %1657
          %1659 = vadd.xlane.f32.xlu0 %v1626
          %v1660 = vpop.xlane.xlu0 %1659
          %1661 = vadd.xlane.f32.xlu0 %v1627
          %v1662 = vpop.xlane.xlu0 %1661
          %1663 = vadd.xlane.f32.xlu0 %v1628
          %v1664 = vpop.xlane.xlu0 %1663
          %1665 = vadd.xlane.f32.xlu0 %v1629
          %v1666 = vpop.xlane.xlu0 %1665
          %1667 = vadd.xlane.f32.xlu0 %v1630
          %v1668 = vpop.xlane.xlu0 %1667
          %1669 = vadd.xlane.f32.xlu0 %v1631
          %v1670 = vpop.xlane.xlu0 %1669
          %1671 = vadd.xlane.f32.xlu0 %v1632
          %v1672 = vpop.xlane.xlu0 %1671
          %1673 = vadd.xlane.f32.xlu0 %v1633
          %v1674 = vpop.xlane.xlu0 %1673
          %1675 = vadd.xlane.f32.xlu0 %v1634
          %v1676 = vpop.xlane.xlu0 %1675
          %1677 = vadd.xlane.f32.xlu0 %v1635
          %v1678 = vpop.xlane.xlu0 %1677
          %1679 = vadd.xlane.f32.xlu0 %v1636
          %v1680 = vpop.xlane.xlu0 %1679
          %1681 = vadd.xlane.f32.xlu0 %v1637
          %v1682 = vpop.xlane.xlu0 %1681
          %1683 = vadd.xlane.f32.xlu0 %v1638
          %v1684 = vpop.xlane.xlu0 %1683
          %1685 = vadd.xlane.f32.xlu0 %v1639
          %v1686 = vpop.xlane.xlu0 %1685
          %1687 = vadd.xlane.f32.xlu0 %v1640
          %v1688 = vpop.xlane.xlu0 %1687
          %1689 = vadd.xlane.f32.xlu0 %v1641
          %v1690 = vpop.xlane.xlu0 %1689
          %1691 = vadd.xlane.f32.xlu0 %v1642
          %v1692 = vpop.xlane.xlu0 %1691
          %1693 = vadd.xlane.f32.xlu0 %v1643
          %v1694 = vpop.xlane.xlu0 %1693
          %1695 = vadd.xlane.f32.xlu0 %v1644
          %v1696 = vpop.xlane.xlu0 %1695
          %1697 = vadd.xlane.f32.xlu0 %v1645
          %v1698 = vpop.xlane.xlu0 %1697
          %1699 = vadd.xlane.f32.xlu0 %v1646
          %v1700 = vpop.xlane.xlu0 %1699
          %1701 = vadd.xlane.f32.xlu0 %v1647
          %v1702 = vpop.xlane.xlu0 %1701
          %1703 = vadd.xlane.f32.xlu0 %v1648
          %v1704 = vpop.xlane.xlu0 %1703
          %1705 = vadd.xlane.f32.xlu0 %v1649
          %v1706 = vpop.xlane.xlu0 %1705
          %1707 = vadd.xlane.f32.xlu0 %v1650
          %v1708 = vpop.xlane.xlu0 %1707
          %1709 = vadd.xlane.f32.xlu0 %v1651
          %v1710 = vpop.xlane.xlu0 %1709
          %1711 = vadd.xlane.f32.xlu0 %v1652
          %v1712 = vpop.xlane.xlu0 %1711
          %1713 = vadd.xlane.f32.xlu0 %v1653
          %v1714 = vpop.xlane.xlu0 %1713
          %1715 = vadd.xlane.f32.xlu0 %v1654
          %v1716 = vpop.xlane.xlu0 %1715
          %1717 = vadd.xlane.f32.xlu0 %v1655
          %v1718 = vpop.xlane.xlu0 %1717
          %1719 = vadd.xlane.f32.xlu0 %v1656
          %v1720 = vpop.xlane.xlu0 %1719
          %v1721 = vmul.f32 %v1658, %v1560
          %v1722 = vmul.f32 %v1660, %v1560
          %v1723 = vmul.f32 %v1662, %v1560
          %v1724 = vmul.f32 %v1664, %v1560
          %v1725 = vmul.f32 %v1666, %v1560
          %v1726 = vmul.f32 %v1668, %v1560
          %v1727 = vmul.f32 %v1670, %v1560
          %v1728 = vmul.f32 %v1672, %v1560
          %v1729 = vmul.f32 %v1674, %v1560
          %v1730 = vmul.f32 %v1676, %v1560
          %v1731 = vmul.f32 %v1678, %v1560
          %v1732 = vmul.f32 %v1680, %v1560
          %v1733 = vmul.f32 %v1682, %v1560
          %v1734 = vmul.f32 %v1684, %v1560
          %v1735 = vmul.f32 %v1686, %v1560
          %v1736 = vmul.f32 %v1688, %v1560
          %v1737 = vmul.f32 %v1690, %v1560
          %v1738 = vmul.f32 %v1692, %v1560
          %v1739 = vmul.f32 %v1694, %v1560
          %v1740 = vmul.f32 %v1696, %v1560
          %v1741 = vmul.f32 %v1698, %v1560
          %v1742 = vmul.f32 %v1700, %v1560
          %v1743 = vmul.f32 %v1702, %v1560
          %v1744 = vmul.f32 %v1704, %v1560
          %v1745 = vmul.f32 %v1706, %v1560
          %v1746 = vmul.f32 %v1708, %v1560
          %v1747 = vmul.f32 %v1710, %v1560
          %v1748 = vmul.f32 %v1712, %v1560
          %v1749 = vmul.f32 %v1714, %v1560
          %v1750 = vmul.f32 %v1716, %v1560
          %v1751 = vmul.f32 %v1718, %v1560
          %v1752 = vmul.f32 %v1720, %v1560
          %v1753 = vadd.f32 %v1721, 1e-05
          %v1754 = vadd.f32 %v1722, 1e-05
          %v1755 = vadd.f32 %v1723, 1e-05
          %v1756 = vadd.f32 %v1724, 1e-05
          %v1757 = vadd.f32 %v1725, 1e-05
          %v1758 = vadd.f32 %v1726, 1e-05
          %v1759 = vadd.f32 %v1727, 1e-05
          %v1760 = vadd.f32 %v1728, 1e-05
          %v1761 = vadd.f32 %v1729, 1e-05
          %v1762 = vadd.f32 %v1730, 1e-05
          %v1763 = vadd.f32 %v1731, 1e-05
          %v1764 = vadd.f32 %v1732, 1e-05
          %v1765 = vadd.f32 %v1733, 1e-05
          %v1766 = vadd.f32 %v1734, 1e-05
          %v1767 = vadd.f32 %v1735, 1e-05
          %v1768 = vadd.f32 %v1736, 1e-05
          %v1769 = vadd.f32 %v1737, 1e-05
          %v1770 = vadd.f32 %v1738, 1e-05
          %v1771 = vadd.f32 %v1739, 1e-05
          %v1772 = vadd.f32 %v1740, 1e-05
          %v1773 = vadd.f32 %v1741, 1e-05
          %v1774 = vadd.f32 %v1742, 1e-05
          %v1775 = vadd.f32 %v1743, 1e-05
          %v1776 = vadd.f32 %v1744, 1e-05
          %v1777 = vadd.f32 %v1745, 1e-05
          %v1778 = vadd.f32 %v1746, 1e-05
          %v1779 = vadd.f32 %v1747, 1e-05
          %v1780 = vadd.f32 %v1748, 1e-05
          %v1781 = vadd.f32 %v1749, 1e-05
          %v1782 = vadd.f32 %v1750, 1e-05
          %v1783 = vadd.f32 %v1751, 1e-05
          %v1784 = vadd.f32 %v1752, 1e-05
          %v1785 = vrsqrt.pop %v1753
          %v1786 = vmul.f32 %v1785, %v1753
          %v1787 = vmul.f32 %v1786, %v1785
          %v1788 = vmul.f32 0.5, %v1787
          %v1789 = vsub.f32 1.5, %v1788
          %v1790 = vmul.f32 %v1785, %v1789
          %vm1791 = vweird.f32 %v1753
          %vm1792 = vweird.f32 %v1785
          %vm1793 = vmor %vm1791, %vm1792
          %v1794 = vsel %vm1793, %v1785, %v1790
          %v1795 = vrsqrt.pop %v1754
          %v1796 = vmul.f32 %v1795, %v1754
          %v1797 = vmul.f32 %v1796, %v1795
          %v1798 = vmul.f32 0.5, %v1797
          %v1799 = vsub.f32 1.5, %v1798
          %v1800 = vmul.f32 %v1795, %v1799
          %vm1801 = vweird.f32 %v1754
          %vm1802 = vweird.f32 %v1795
          %vm1803 = vmor %vm1801, %vm1802
          %v1804 = vsel %vm1803, %v1795, %v1800
          %v1805 = vrsqrt.pop %v1755
          %v1806 = vmul.f32 %v1805, %v1755
          %v1807 = vmul.f32 %v1806, %v1805
          %v1808 = vmul.f32 0.5, %v1807
          %v1809 = vsub.f32 1.5, %v1808
          %v1810 = vmul.f32 %v1805, %v1809
          %vm1811 = vweird.f32 %v1755
          %vm1812 = vweird.f32 %v1805
          %vm1813 = vmor %vm1811, %vm1812
          %v1814 = vsel %vm1813, %v1805, %v1810
          %v1815 = vrsqrt.pop %v1756
          %v1816 = vmul.f32 %v1815, %v1756
          %v1817 = vmul.f32 %v1816, %v1815
          %v1818 = vmul.f32 0.5, %v1817
          %v1819 = vsub.f32 1.5, %v1818
          %v1820 = vmul.f32 %v1815, %v1819
          %vm1821 = vweird.f32 %v1756
          %vm1822 = vweird.f32 %v1815
          %vm1823 = vmor %vm1821, %vm1822
          %v1824 = vsel %vm1823, %v1815, %v1820
          %v1825 = vrsqrt.pop %v1757
          %v1826 = vmul.f32 %v1825, %v1757
          %v1827 = vmul.f32 %v1826, %v1825
          %v1828 = vmul.f32 0.5, %v1827
          %v1829 = vsub.f32 1.5, %v1828
          %v1830 = vmul.f32 %v1825, %v1829
          %vm1831 = vweird.f32 %v1757
          %vm1832 = vweird.f32 %v1825
          %vm1833 = vmor %vm1831, %vm1832
          %v1834 = vsel %vm1833, %v1825, %v1830
          %v1835 = vrsqrt.pop %v1758
          %v1836 = vmul.f32 %v1835, %v1758
          %v1837 = vmul.f32 %v1836, %v1835
          %v1838 = vmul.f32 0.5, %v1837
          %v1839 = vsub.f32 1.5, %v1838
          %v1840 = vmul.f32 %v1835, %v1839
          %vm1841 = vweird.f32 %v1758
          %vm1842 = vweird.f32 %v1835
          %vm1843 = vmor %vm1841, %vm1842
          %v1844 = vsel %vm1843, %v1835, %v1840
          %v1845 = vrsqrt.pop %v1759
          %v1846 = vmul.f32 %v1845, %v1759
          %v1847 = vmul.f32 %v1846, %v1845
          %v1848 = vmul.f32 0.5, %v1847
          %v1849 = vsub.f32 1.5, %v1848
          %v1850 = vmul.f32 %v1845, %v1849
          %vm1851 = vweird.f32 %v1759
          %vm1852 = vweird.f32 %v1845
          %vm1853 = vmor %vm1851, %vm1852
          %v1854 = vsel %vm1853, %v1845, %v1850
          %v1855 = vrsqrt.pop %v1760
          %v1856 = vmul.f32 %v1855, %v1760
          %v1857 = vmul.f32 %v1856, %v1855
          %v1858 = vmul.f32 0.5, %v1857
          %v1859 = vsub.f32 1.5, %v1858
          %v1860 = vmul.f32 %v1855, %v1859
          %vm1861 = vweird.f32 %v1760
          %vm1862 = vweird.f32 %v1855
          %vm1863 = vmor %vm1861, %vm1862
          %v1864 = vsel %vm1863, %v1855, %v1860
          %v1865 = vrsqrt.pop %v1761
          %v1866 = vmul.f32 %v1865, %v1761
          %v1867 = vmul.f32 %v1866, %v1865
          %v1868 = vmul.f32 0.5, %v1867
          %v1869 = vsub.f32 1.5, %v1868
          %v1870 = vmul.f32 %v1865, %v1869
          %vm1871 = vweird.f32 %v1761
          %vm1872 = vweird.f32 %v1865
          %vm1873 = vmor %vm1871, %vm1872
          %v1874 = vsel %vm1873, %v1865, %v1870
          %v1875 = vrsqrt.pop %v1762
          %v1876 = vmul.f32 %v1875, %v1762
          %v1877 = vmul.f32 %v1876, %v1875
          %v1878 = vmul.f32 0.5, %v1877
          %v1879 = vsub.f32 1.5, %v1878
          %v1880 = vmul.f32 %v1875, %v1879
          %vm1881 = vweird.f32 %v1762
          %vm1882 = vweird.f32 %v1875
          %vm1883 = vmor %vm1881, %vm1882
          %v1884 = vsel %vm1883, %v1875, %v1880
          %v1885 = vrsqrt.pop %v1763
          %v1886 = vmul.f32 %v1885, %v1763
          %v1887 = vmul.f32 %v1886, %v1885
          %v1888 = vmul.f32 0.5, %v1887
          %v1889 = vsub.f32 1.5, %v1888
          %v1890 = vmul.f32 %v1885, %v1889
          %vm1891 = vweird.f32 %v1763
          %vm1892 = vweird.f32 %v1885
          %vm1893 = vmor %vm1891, %vm1892
          %v1894 = vsel %vm1893, %v1885, %v1890
          %v1895 = vrsqrt.pop %v1764
          %v1896 = vmul.f32 %v1895, %v1764
          %v1897 = vmul.f32 %v1896, %v1895
          %v1898 = vmul.f32 0.5, %v1897
          %v1899 = vsub.f32 1.5, %v1898
          %v1900 = vmul.f32 %v1895, %v1899
          %vm1901 = vweird.f32 %v1764
          %vm1902 = vweird.f32 %v1895
          %vm1903 = vmor %vm1901, %vm1902
          %v1904 = vsel %vm1903, %v1895, %v1900
          %v1905 = vrsqrt.pop %v1765
          %v1906 = vmul.f32 %v1905, %v1765
          %v1907 = vmul.f32 %v1906, %v1905
          %v1908 = vmul.f32 0.5, %v1907
          %v1909 = vsub.f32 1.5, %v1908
          %v1910 = vmul.f32 %v1905, %v1909
          %vm1911 = vweird.f32 %v1765
          %vm1912 = vweird.f32 %v1905
          %vm1913 = vmor %vm1911, %vm1912
          %v1914 = vsel %vm1913, %v1905, %v1910
          %v1915 = vrsqrt.pop %v1766
          %v1916 = vmul.f32 %v1915, %v1766
          %v1917 = vmul.f32 %v1916, %v1915
          %v1918 = vmul.f32 0.5, %v1917
          %v1919 = vsub.f32 1.5, %v1918
          %v1920 = vmul.f32 %v1915, %v1919
          %vm1921 = vweird.f32 %v1766
          %vm1922 = vweird.f32 %v1915
          %vm1923 = vmor %vm1921, %vm1922
          %v1924 = vsel %vm1923, %v1915, %v1920
          %v1925 = vrsqrt.pop %v1767
          %v1926 = vmul.f32 %v1925, %v1767
          %v1927 = vmul.f32 %v1926, %v1925
          %v1928 = vmul.f32 0.5, %v1927
          %v1929 = vsub.f32 1.5, %v1928
          %v1930 = vmul.f32 %v1925, %v1929
          %vm1931 = vweird.f32 %v1767
          %vm1932 = vweird.f32 %v1925
          %vm1933 = vmor %vm1931, %vm1932
          %v1934 = vsel %vm1933, %v1925, %v1930
          %v1935 = vrsqrt.pop %v1768
          %v1936 = vmul.f32 %v1935, %v1768
          %v1937 = vmul.f32 %v1936, %v1935
          %v1938 = vmul.f32 0.5, %v1937
          %v1939 = vsub.f32 1.5, %v1938
          %v1940 = vmul.f32 %v1935, %v1939
          %vm1941 = vweird.f32 %v1768
          %vm1942 = vweird.f32 %v1935
          %vm1943 = vmor %vm1941, %vm1942
          %v1944 = vsel %vm1943, %v1935, %v1940
          %v1945 = vrsqrt.pop %v1769
          %v1946 = vmul.f32 %v1945, %v1769
          %v1947 = vmul.f32 %v1946, %v1945
          %v1948 = vmul.f32 0.5, %v1947
          %v1949 = vsub.f32 1.5, %v1948
          %v1950 = vmul.f32 %v1945, %v1949
          %vm1951 = vweird.f32 %v1769
          %vm1952 = vweird.f32 %v1945
          %vm1953 = vmor %vm1951, %vm1952
          %v1954 = vsel %vm1953, %v1945, %v1950
          %v1955 = vrsqrt.pop %v1770
          %v1956 = vmul.f32 %v1955, %v1770
          %v1957 = vmul.f32 %v1956, %v1955
          %v1958 = vmul.f32 0.5, %v1957
          %v1959 = vsub.f32 1.5, %v1958
          %v1960 = vmul.f32 %v1955, %v1959
          %vm1961 = vweird.f32 %v1770
          %vm1962 = vweird.f32 %v1955
          %vm1963 = vmor %vm1961, %vm1962
          %v1964 = vsel %vm1963, %v1955, %v1960
          %v1965 = vrsqrt.pop %v1771
          %v1966 = vmul.f32 %v1965, %v1771
          %v1967 = vmul.f32 %v1966, %v1965
          %v1968 = vmul.f32 0.5, %v1967
          %v1969 = vsub.f32 1.5, %v1968
          %v1970 = vmul.f32 %v1965, %v1969
          %vm1971 = vweird.f32 %v1771
          %vm1972 = vweird.f32 %v1965
          %vm1973 = vmor %vm1971, %vm1972
          %v1974 = vsel %vm1973, %v1965, %v1970
          %v1975 = vrsqrt.pop %v1772
          %v1976 = vmul.f32 %v1975, %v1772
          %v1977 = vmul.f32 %v1976, %v1975
          %v1978 = vmul.f32 0.5, %v1977
          %v1979 = vsub.f32 1.5, %v1978
          %v1980 = vmul.f32 %v1975, %v1979
          %vm1981 = vweird.f32 %v1772
          %vm1982 = vweird.f32 %v1975
          %vm1983 = vmor %vm1981, %vm1982
          %v1984 = vsel %vm1983, %v1975, %v1980
          %v1985 = vrsqrt.pop %v1773
          %v1986 = vmul.f32 %v1985, %v1773
          %v1987 = vmul.f32 %v1986, %v1985
          %v1988 = vmul.f32 0.5, %v1987
          %v1989 = vsub.f32 1.5, %v1988
          %v1990 = vmul.f32 %v1985, %v1989
          %vm1991 = vweird.f32 %v1773
          %vm1992 = vweird.f32 %v1985
          %vm1993 = vmor %vm1991, %vm1992
          %v1994 = vsel %vm1993, %v1985, %v1990
          %v1995 = vrsqrt.pop %v1774
          %v1996 = vmul.f32 %v1995, %v1774
          %v1997 = vmul.f32 %v1996, %v1995
          %v1998 = vmul.f32 0.5, %v1997
          %v1999 = vsub.f32 1.5, %v1998
          %v2000 = vmul.f32 %v1995, %v1999
          %vm2001 = vweird.f32 %v1774
          %vm2002 = vweird.f32 %v1995
          %vm2003 = vmor %vm2001, %vm2002
          %v2004 = vsel %vm2003, %v1995, %v2000
          %v2005 = vrsqrt.pop %v1775
          %v2006 = vmul.f32 %v2005, %v1775
          %v2007 = vmul.f32 %v2006, %v2005
          %v2008 = vmul.f32 0.5, %v2007
          %v2009 = vsub.f32 1.5, %v2008
          %v2010 = vmul.f32 %v2005, %v2009
          %vm2011 = vweird.f32 %v1775
          %vm2012 = vweird.f32 %v2005
          %vm2013 = vmor %vm2011, %vm2012
          %v2014 = vsel %vm2013, %v2005, %v2010
          %v2015 = vrsqrt.pop %v1776
          %v2016 = vmul.f32 %v2015, %v1776
          %v2017 = vmul.f32 %v2016, %v2015
          %v2018 = vmul.f32 0.5, %v2017
          %v2019 = vsub.f32 1.5, %v2018
          %v2020 = vmul.f32 %v2015, %v2019
          %vm2021 = vweird.f32 %v1776
          %vm2022 = vweird.f32 %v2015
          %vm2023 = vmor %vm2021, %vm2022
          %v2024 = vsel %vm2023, %v2015, %v2020
          %v2025 = vrsqrt.pop %v1777
          %v2026 = vmul.f32 %v2025, %v1777
          %v2027 = vmul.f32 %v2026, %v2025
          %v2028 = vmul.f32 0.5, %v2027
          %v2029 = vsub.f32 1.5, %v2028
          %v2030 = vmul.f32 %v2025, %v2029
          %vm2031 = vweird.f32 %v1777
          %vm2032 = vweird.f32 %v2025
          %vm2033 = vmor %vm2031, %vm2032
          %v2034 = vsel %vm2033, %v2025, %v2030
          %v2035 = vrsqrt.pop %v1778
          %v2036 = vmul.f32 %v2035, %v1778
          %v2037 = vmul.f32 %v2036, %v2035
          %v2038 = vmul.f32 0.5, %v2037
          %v2039 = vsub.f32 1.5, %v2038
          %v2040 = vmul.f32 %v2035, %v2039
          %vm2041 = vweird.f32 %v1778
          %vm2042 = vweird.f32 %v2035
          %vm2043 = vmor %vm2041, %vm2042
          %v2044 = vsel %vm2043, %v2035, %v2040
          %v2045 = vrsqrt.pop %v1779
          %v2046 = vmul.f32 %v2045, %v1779
          %v2047 = vmul.f32 %v2046, %v2045
          %v2048 = vmul.f32 0.5, %v2047
          %v2049 = vsub.f32 1.5, %v2048
          %v2050 = vmul.f32 %v2045, %v2049
          %vm2051 = vweird.f32 %v1779
          %vm2052 = vweird.f32 %v2045
          %vm2053 = vmor %vm2051, %vm2052
          %v2054 = vsel %vm2053, %v2045, %v2050
          %v2055 = vrsqrt.pop %v1780
          %v2056 = vmul.f32 %v2055, %v1780
          %v2057 = vmul.f32 %v2056, %v2055
          %v2058 = vmul.f32 0.5, %v2057
          %v2059 = vsub.f32 1.5, %v2058
          %v2060 = vmul.f32 %v2055, %v2059
          %vm2061 = vweird.f32 %v1780
          %vm2062 = vweird.f32 %v2055
          %vm2063 = vmor %vm2061, %vm2062
          %v2064 = vsel %vm2063, %v2055, %v2060
          %v2065 = vrsqrt.pop %v1781
          %v2066 = vmul.f32 %v2065, %v1781
          %v2067 = vmul.f32 %v2066, %v2065
          %v2068 = vmul.f32 0.5, %v2067
          %v2069 = vsub.f32 1.5, %v2068
          %v2070 = vmul.f32 %v2065, %v2069
          %vm2071 = vweird.f32 %v1781
          %vm2072 = vweird.f32 %v2065
          %vm2073 = vmor %vm2071, %vm2072
          %v2074 = vsel %vm2073, %v2065, %v2070
          %v2075 = vrsqrt.pop %v1782
          %v2076 = vmul.f32 %v2075, %v1782
          %v2077 = vmul.f32 %v2076, %v2075
          %v2078 = vmul.f32 0.5, %v2077
          %v2079 = vsub.f32 1.5, %v2078
          %v2080 = vmul.f32 %v2075, %v2079
          %vm2081 = vweird.f32 %v1782
          %vm2082 = vweird.f32 %v2075
          %vm2083 = vmor %vm2081, %vm2082
          %v2084 = vsel %vm2083, %v2075, %v2080
          %v2085 = vrsqrt.pop %v1783
          %v2086 = vmul.f32 %v2085, %v1783
          %v2087 = vmul.f32 %v2086, %v2085
          %v2088 = vmul.f32 0.5, %v2087
          %v2089 = vsub.f32 1.5, %v2088
          %v2090 = vmul.f32 %v2085, %v2089
          %vm2091 = vweird.f32 %v1783
          %vm2092 = vweird.f32 %v2085
          %vm2093 = vmor %vm2091, %vm2092
          %v2094 = vsel %vm2093, %v2085, %v2090
          %v2095 = vrsqrt.pop %v1784
          %v2096 = vmul.f32 %v2095, %v1784
          %v2097 = vmul.f32 %v2096, %v2095
          %v2098 = vmul.f32 0.5, %v2097
          %v2099 = vsub.f32 1.5, %v2098
          %v2100 = vmul.f32 %v2095, %v2099
          %vm2101 = vweird.f32 %v1784
          %vm2102 = vweird.f32 %v2095
          %vm2103 = vmor %vm2101, %vm2102
          %v2104 = vsel %vm2103, %v2095, %v2100
          %v2105 = vmul.f32 %v1593, %v1794
          %v2106 = vmul.f32 %v1594, %v1804
          %v2107 = vmul.f32 %v1595, %v1814
          %v2108 = vmul.f32 %v1596, %v1824
          %v2109 = vmul.f32 %v1597, %v1834
          %v2110 = vmul.f32 %v1598, %v1844
          %v2111 = vmul.f32 %v1599, %v1854
          %v2112 = vmul.f32 %v1600, %v1864
          %v2113 = vmul.f32 %v1601, %v1874
          %v2114 = vmul.f32 %v1602, %v1884
          %v2115 = vmul.f32 %v1603, %v1894
          %v2116 = vmul.f32 %v1604, %v1904
          %v2117 = vmul.f32 %v1605, %v1914
          %v2118 = vmul.f32 %v1606, %v1924
          %v2119 = vmul.f32 %v1607, %v1934
          %v2120 = vmul.f32 %v1608, %v1944
          %v2121 = vmul.f32 %v1609, %v1954
          %v2122 = vmul.f32 %v1610, %v1964
          %v2123 = vmul.f32 %v1611, %v1974
          %v2124 = vmul.f32 %v1612, %v1984
          %v2125 = vmul.f32 %v1613, %v1994
          %v2126 = vmul.f32 %v1614, %v2004
          %v2127 = vmul.f32 %v1615, %v2014
          %v2128 = vmul.f32 %v1616, %v2024
          %v2129 = vmul.f32 %v1617, %v2034
          %v2130 = vmul.f32 %v1618, %v2044
          %v2131 = vmul.f32 %v1619, %v2054
          %v2132 = vmul.f32 %v1620, %v2064
          %v2133 = vmul.f32 %v1621, %v2074
          %v2134 = vmul.f32 %v1622, %v2084
          %v2135 = vmul.f32 %v1623, %v2094
          %v2136 = vmul.f32 %v1624, %v2104
          %v2137 = vld [vmem:[%s5] sm:$0x1]
          %v2139 = vperm.slane %v2137, 0
          %v2141 = vmul.f32 %v2105, %v2139
          %v2142 = vmul.f32 %v2106, %v2139
          %v2143 = vmul.f32 %v2107, %v2139
          %v2144 = vmul.f32 %v2108, %v2139
          %v2145 = vmul.f32 %v2109, %v2139
          %v2146 = vmul.f32 %v2110, %v2139
          %v2147 = vmul.f32 %v2111, %v2139
          %v2148 = vmul.f32 %v2112, %v2139
          %v2149 = vmul.f32 %v2113, %v2139
          %v2150 = vmul.f32 %v2114, %v2139
          %v2151 = vmul.f32 %v2115, %v2139
          %v2152 = vmul.f32 %v2116, %v2139
          %v2153 = vmul.f32 %v2117, %v2139
          %v2154 = vmul.f32 %v2118, %v2139
          %v2155 = vmul.f32 %v2119, %v2139
          %v2156 = vmul.f32 %v2120, %v2139
          %v2157 = vmul.f32 %v2121, %v2139
          %v2158 = vmul.f32 %v2122, %v2139
          %v2159 = vmul.f32 %v2123, %v2139
          %v2160 = vmul.f32 %v2124, %v2139
          %v2161 = vmul.f32 %v2125, %v2139
          %v2162 = vmul.f32 %v2126, %v2139
          %v2163 = vmul.f32 %v2127, %v2139
          %v2164 = vmul.f32 %v2128, %v2139
          %v2165 = vmul.f32 %v2129, %v2139
          %v2166 = vmul.f32 %v2130, %v2139
          %v2167 = vmul.f32 %v2131, %v2139
          %v2168 = vmul.f32 %v2132, %v2139
          %v2169 = vmul.f32 %v2133, %v2139
          %v2170 = vmul.f32 %v2134, %v2139
          %v2171 = vmul.f32 %v2135, %v2139
          %v2172 = vmul.f32 %v2136, %v2139
          %v2173 = vld [vmem:[%s6] sm:$0x1]
          %v2175 = vperm.slane %v2173, 0
          %v2177 = vadd.f32 %v2141, %v2175
          %v2178 = vadd.f32 %v2142, %v2175
          %v2179 = vadd.f32 %v2143, %v2175
          %v2180 = vadd.f32 %v2144, %v2175
          %v2181 = vadd.f32 %v2145, %v2175
          %v2182 = vadd.f32 %v2146, %v2175
          %v2183 = vadd.f32 %v2147, %v2175
          %v2184 = vadd.f32 %v2148, %v2175
          %v2185 = vadd.f32 %v2149, %v2175
          %v2186 = vadd.f32 %v2150, %v2175
          %v2187 = vadd.f32 %v2151, %v2175
          %v2188 = vadd.f32 %v2152, %v2175
          %v2189 = vadd.f32 %v2153, %v2175
          %v2190 = vadd.f32 %v2154, %v2175
          %v2191 = vadd.f32 %v2155, %v2175
          %v2192 = vadd.f32 %v2156, %v2175
          %v2193 = vadd.f32 %v2157, %v2175
          %v2194 = vadd.f32 %v2158, %v2175
          %v2195 = vadd.f32 %v2159, %v2175
          %v2196 = vadd.f32 %v2160, %v2175
          %v2197 = vadd.f32 %v2161, %v2175
          %v2198 = vadd.f32 %v2162, %v2175
          %v2199 = vadd.f32 %v2163, %v2175
          %v2200 = vadd.f32 %v2164, %v2175
          %v2201 = vadd.f32 %v2165, %v2175
          %v2202 = vadd.f32 %v2166, %v2175
          %v2203 = vadd.f32 %v2167, %v2175
          %v2204 = vadd.f32 %v2168, %v2175
          %v2205 = vadd.f32 %v2169, %v2175
          %v2206 = vadd.f32 %v2170, %v2175
          %v2207 = vadd.f32 %v2171, %v2175
          %v2208 = vadd.f32 %v2172, %v2175
          %2209 = vst [vmem:[#allocation11] sm:$0xff] %v2177
          %2210 = vst [vmem:[#allocation11 + $0x8] sm:$0xff] %v2178
          %2211 = vst [vmem:[#allocation11 + $0x10] sm:$0xff] %v2179
          %2212 = vst [vmem:[#allocation11 + $0x18] sm:$0xff] %v2180
          %2213 = vst [vmem:[#allocation11 + $0x20] sm:$0xff] %v2181
          %2214 = vst [vmem:[#allocation11 + $0x28] sm:$0xff] %v2182
          %2215 = vst [vmem:[#allocation11 + $0x30] sm:$0xff] %v2183
          %2216 = vst [vmem:[#allocation11 + $0x38] sm:$0xff] %v2184
          %2217 = vst [vmem:[#allocation11 + $0x40] sm:$0xff] %v2185
          %2218 = vst [vmem:[#allocation11 + $0x48] sm:$0xff] %v2186
          %2219 = vst [vmem:[#allocation11 + $0x50] sm:$0xff] %v2187
          %2220 = vst [vmem:[#allocation11 + $0x58] sm:$0xff] %v2188
          %2221 = vst [vmem:[#allocation11 + $0x60] sm:$0xff] %v2189
          %2222 = vst [vmem:[#allocation11 + $0x68] sm:$0xff] %v2190
          %2223 = vst [vmem:[#allocation11 + $0x70] sm:$0xff] %v2191
          %2224 = vst [vmem:[#allocation11 + $0x78] sm:$0xff] %v2192
          %2225 = vst [vmem:[#allocation11 + $0x80] sm:$0xff] %v2193
          %2226 = vst [vmem:[#allocation11 + $0x88] sm:$0xff] %v2194
          %2227 = vst [vmem:[#allocation11 + $0x90] sm:$0xff] %v2195
          %2228 = vst [vmem:[#allocation11 + $0x98] sm:$0xff] %v2196
          %2229 = vst [vmem:[#allocation11 + $0xa0] sm:$0xff] %v2197
          %2230 = vst [vmem:[#allocation11 + $0xa8] sm:$0xff] %v2198
          %2231 = vst [vmem:[#allocation11 + $0xb0] sm:$0xff] %v2199
          %2232 = vst [vmem:[#allocation11 + $0xb8] sm:$0xff] %v2200
          %2233 = vst [vmem:[#allocation11 + $0xc0] sm:$0xff] %v2201
          %2234 = vst [vmem:[#allocation11 + $0xc8] sm:$0xff] %v2202
          %2235 = vst [vmem:[#allocation11 + $0xd0] sm:$0xff] %v2203
          %2236 = vst [vmem:[#allocation11 + $0xd8] sm:$0xff] %v2204
          %2237 = vst [vmem:[#allocation11 + $0xe0] sm:$0xff] %v2205
          %2238 = vst [vmem:[#allocation11 + $0xe8] sm:$0xff] %v2206
          %2239 = vst [vmem:[#allocation11 + $0xf0] sm:$0xff] %v2207
          %2240 = vst [vmem:[#allocation11 + $0xf8] sm:$0xff] %v2208
        $region72: #{tpu_custom_call.1} parent=47 // pred_fallthru
          _
        // Predicated region
        $region73: #{tpu_custom_call.1} parent=47 // pred_check
          %p2241 = pneg %p223
        $region74: #{tpu_custom_call.1} parent=47 // pred_check_branch
          %2243 = sbr.rel (%p2241) target = $region76
        $region75: #{tpu_custom_call.1} parent=47 // pred_region
          %s2244 = smul.u32 32, %s30
          %2246 = vsyncadd [#allocation5], 0
          %s2247 = smul.addr %s2244, 8
          %s2248 = scalar_lea.hbm %s7, %s2247
          %s2249 = sshll.u32 [#allocation11], 4
          %s2250 = int_to_ptr.vmem [resolvable:$true] %s2249
          %s2251 = sshll.u32 %s2248, 4
          %s2252 = int_to_ptr.hbm [resolvable:$true] %s2251
          %2257 = dma.vmem_to_hbm [thread:$0]  %s2250, 4096, %s2252, [#allocation5], 128, 128, 8
        $region76: #{tpu_custom_call.1} parent=47 // pred_fallthru
          _
        // Predicated region
        $region77: #{tpu_custom_call.1} parent=47 // pred_check
          %p2258 = pneg %p223
        $region78: #{tpu_custom_call.1} parent=47 // pred_check_branch
          %2260 = sbr.rel (%p2258) target = $region80
        $region79: #{tpu_custom_call.1} parent=47 // pred_region
          %2262 = dma.done [#allocation5], 4096
        $region80: #{tpu_custom_call.1} parent=47 // pred_fallthru
          _
      $region48: #{tpu_custom_call.1} parent=5 // pred_fallthru
        _
      %p2263 = scmp.le.s32.totalorder 2, %s21
      // Predicated region
      $region81: #{tpu_custom_call.1} parent=5 // pred_check
        %p2264 = pneg %p2263
      $region82: #{tpu_custom_call.1} parent=5 // pred_check_branch
        %2266 = sbr.rel (%p2264) target = $region84
      $region83: #{tpu_custom_call.1} parent=5 // pred_region
        %s2267 = ssub.s32 %s21, 2
      $region84: #{tpu_custom_call.1} parent=5 // pred_fallthru
        _
    $region6: #{tpu_custom_call.1} parent=1 // loop_footer
      %s25 = sadd.s32 1, %s21
    $region7: #{tpu_custom_call.1} parent=1 // loop_footer_branch
      %20 = sbr.rel target = $region3
    $region8: #{tpu_custom_call.1} parent=1 // loop_exit
      _
    %2268 = vsyncpa [#allocation4], 1
    %s2269 = scalar_lea.sflag [#allocation4], 1
    %2270 = vsyncpa %s2269, 1
    %2271 = vsyncpa [#allocation7], 1
    %s2272 = scalar_lea.sflag [#allocation7], 1
    %2273 = vsyncpa %s2272, 1
    %2274 = vsyncpa [#allocation10], 1
    %s2275 = scalar_lea.sflag [#allocation10], 1
    %2276 = vsyncpa %s2275, 1
    %2277 = vsyncpa [#allocation5], 1
    %s2278 = scalar_lea.sflag [#allocation5], 1
    %2279 = vsyncpa %s2278, 1

</llo_original>
